<compile_context>
chip_gen: v5e
topology: v5e:2x2
jax: 0.10.0
libtpu: 0.0.40
codegen_flags: <defaults>
</compile_context>

<pallas_src>
import functools

import jax
import jax.numpy as jnp
from jax import lax
from jax.experimental import pallas as pl
from jax.experimental.pallas import tpu as pltpu

_EPS = 1e-5
_INV_SQRT2 = 0.7071067811865476


def _gelu_exact(x):
    # Exact (erf) GELU, matching F.gelu's default.
    return 0.5 * x * (1.0 + lax.erf(x * _INV_SQRT2))


# ---------------------------------------------------------------------------
# shared in-kernel helper: 3x3 "same" conv along H as 3 row-shifted matmuls
# ---------------------------------------------------------------------------
def _conv3x3_rows(a, w_ref, H, n_imgs):
    """a: (n_imgs*H, K) bf16 activation rows (images stacked, no halo rows);
    w_ref: (3, K, M) width-banded weights.  Returns f32 (n_imgs*H, M).

    Row shifts are value-level (zero-row concat), so there is no padded VMEM
    scratch and no doubled vector-store traffic; cross-image bleed (only when
    several images share a block) is removed with a per-row mask."""
    BH, K = a.shape
    zero_row = jnp.zeros((1, K), a.dtype)
    up = jnp.concatenate([zero_row, a[:-1, :]], axis=0)   # up[j] = a[j-1]
    dn = jnp.concatenate([a[1:, :], zero_row], axis=0)    # dn[j] = a[j+1]
    if n_imgs > 1:
        row = lax.broadcasted_iota(jnp.int32, (BH, 1), 0) % H
        zero = jnp.zeros_like(a)
        up = jnp.where(row == 0, zero, up)
        dn = jnp.where(row == H - 1, zero, dn)
    acc = jnp.dot(up, w_ref[0], preferred_element_type=jnp.float32)
    acc = acc + jnp.dot(a, w_ref[1], preferred_element_type=jnp.float32)
    acc = acc + jnp.dot(dn, w_ref[2], preferred_element_type=jnp.float32)
    return acc


# ---------------------------------------------------------------------------
# pass 1: conv1 (3x3, pad=1) + partial BN1 stats
# ---------------------------------------------------------------------------
def _pass1_kernel(x_ref, w1_ref, y1_ref, st_ref, *, H, n_imgs):
    # x_ref : (B_blk*H, W*Cin) bf16 ; w1_ref: (3, W*Cin, W*Cout) bf16
    # y1_ref: (B_blk*H, W*Cout) bf16 ; st_ref: (1, 2, W*Cout) f32 [sum, sum_sq]
    acc = _conv3x3_rows(x_ref[...], w1_ref, H, n_imgs)
    st_ref[0, 0:1, :] = jnp.sum(acc, axis=0, keepdims=True)
    st_ref[0, 1:2, :] = jnp.sum(acc * acc, axis=0, keepdims=True)
    y1_ref[...] = acc.astype(y1_ref.dtype)


# ---------------------------------------------------------------------------
# pass 2: BN1 (global stats) + GELU + conv2 (3x3, pad=1) + partial BN2 stats
# ---------------------------------------------------------------------------
def _pass2_kernel(y1_ref, sc1_ref, sh1_ref, w2_ref, y2_ref, st_ref, *, H, n_imgs):
    a = y1_ref[...].astype(jnp.float32) * sc1_ref[...] + sh1_ref[...]
    a = _gelu_exact(a)                                     # BN1 + GELU, lane-dense
    acc = _conv3x3_rows(a.astype(y1_ref.dtype), w2_ref, H, n_imgs)
    st_ref[0, 0:1, :] = jnp.sum(acc, axis=0, keepdims=True)
    st_ref[0, 1:2, :] = jnp.sum(acc * acc, axis=0, keepdims=True)
    y2_ref[...] = acc.astype(y2_ref.dtype)


# ---------------------------------------------------------------------------
# pass 3: BN2 (global stats) + residual add + GELU   (elementwise, lane-dense)
# ---------------------------------------------------------------------------
def _pass3_identity_kernel(y2_ref, x_ref, sc2_ref, sh2_ref, o_ref):
    # identity branch read straight from the (full-precision) input; never
    # materialized to HBM by an earlier pass.
    a = y2_ref[...].astype(jnp.float32) * sc2_ref[...] + sh2_ref[...]
    a = a + x_ref[...].astype(jnp.float32)
    o_ref[...] = _gelu_exact(a).astype(o_ref.dtype)


def _pass3_downsample_kernel(y2_ref, x_ref, wd_ref, sc2_ref, sh2_ref, o_ref):
    # 1x1 downsample recomputed in-kernel (block-diag matmul) from x.
    ident = jnp.dot(x_ref[...], wd_ref[...], preferred_element_type=jnp.float32)
    a = y2_ref[...].astype(jnp.float32) * sc2_ref[...] + sh2_ref[...] + ident
    o_ref[...] = _gelu_exact(a).astype(o_ref.dtype)


# ---------------------------------------------------------------------------
# wrapper-side helpers (plain XLA)
# ---------------------------------------------------------------------------
def _band_conv_weights(w, W):
    """(3, 3, Cin, Cout) HWIO conv weights -> (3, W*Cin, W*Cout) width-banded
    matmul weights: big[kh, wi*Cin+ci, wo*Cout+co] = w[kh, kw, ci, co] where
    wi == wo + kw - 1 (zero elsewhere).  W-padding is folded into the band."""
    _, _, Cin, Cout = w.shape
    wi = jnp.arange(W)[:, None]
    wo = jnp.arange(W)[None, :]
    big = jnp.zeros((3, W, Cin, W, Cout), jnp.float32)
    for kw in range(3):
        sel = (wi == wo + (kw - 1)).astype(jnp.float32)              # (W, W)
        big = big + sel[None, :, None, :, None] * w[:, kw][:, None, :, None, :]
    return big.reshape(3, W * Cin, W * Cout)


def _diag_1x1_weights(wd, W):
    """(Cin, Cout) 1x1 conv weights -> (W*Cin, W*Cout) block-diagonal matmul."""
    Cin, Cout = wd.shape
    eye = jnp.eye(W, dtype=jnp.float32)
    big = eye[:, None, :, None] * wd[None, :, None, :]
    return big.reshape(W * Cin, W * Cout)


def _bn_scale_shift(partial_stats, gamma, beta, count, W, Cout):
    """Fold per-block partial sums into global-batch BN scale/shift tiled to
    the width-flattened lane layout (1, W*Cout).  Biased variance, eps=1e-5.
    Also returns (mean, biased var) per channel."""
    s = jnp.sum(partial_stats.astype(jnp.float32), axis=0)           # (2, W*Cout)
    s = s.reshape(2, W, Cout).sum(axis=1)                            # (2, Cout)
    mean = s[0] / count
    var = s[1] / count - mean * mean
    scale_c = gamma * lax.rsqrt(var + _EPS)
    shift_c = beta - mean * scale_c
    scale = jnp.tile(scale_c, W).reshape(1, W * Cout).astype(jnp.float32)
    shift = jnp.tile(shift_c, W).reshape(1, W * Cout).astype(jnp.float32)
    return scale, shift, mean, var


def _pick_image_block(n_images, height, target_rows=256):
    """Images per grid step for passes 1-2: aim for ~target_rows matmul rows,
    keep >= 2 grid steps when possible (v7x core sharding), keep the block row
    count 8-aligned (or fall back to one full-array block)."""
    if height % 8 != 0:
        return n_images   # TODO(synk): ragged H needs masked row tiling
    cap = n_images if n_images == 1 else n_images // 2
    want = max(1, min(cap, -(-target_rows // height)))
    for b in range(want, 0, -1):
        if n_images % b == 0:
            return b
    return 1


def _pick_row_tile(rows):
    """Pass-3 row tile: largest 8-aligned divisor of `rows` that is <= 512,
    preferring >= 2 grid steps.  Never returns an arbitrarily large block."""
    cands = [tr for tr in range(8, min(rows, 512) + 1, 8) if rows % tr == 0]
    if not cands:
        return rows                       # rows < 8 or not 8-aligned: one block
    multi = [tr for tr in cands if rows // tr >= 2]
    return max(multi) if multi else max(cands)


def prepare_residual_block_params(params, W, *, stride=1,
                                  compute_dtype=jnp.bfloat16):
    """One-time (per layer) weight preparation, hoisted out of the forward
    path: width-banded conv weights, block-diag 1x1 downsample, bf16 casts."""
    w1 = jnp.asarray(params["w1"], jnp.float32)       # (3,3,Cin,Cout)
    w2 = jnp.asarray(params["w2"], jnp.float32)       # (3,3,Cout,Cout)
    Cin, Cout = w1.shape[2], w1.shape[3]
    has_downsample = (stride != 1) or (Cin != Cout)
    prepped = {
        "w1b": _band_conv_weights(w1, W).astype(compute_dtype),
        "w2b": _band_conv_weights(w2, W).astype(compute_dtype),
        "g1": jnp.asarray(params["g1"], jnp.float32).reshape(-1),
        "b1": jnp.asarray(params["b1"], jnp.float32).reshape(-1),
        "g2": jnp.asarray(params["g2"], jnp.float32).reshape(-1),
        "b2": jnp.asarray(params["b2"], jnp.float32).reshape(-1),
    }
    if has_downsample:
        prepped["wdb"] = _diag_1x1_weights(
            jnp.asarray(params["wd"], jnp.float32), W).astype(compute_dtype)
    return prepped


# ---------------------------------------------------------------------------
# public entry point (NHWC in / NHWC out)
# ---------------------------------------------------------------------------
def residual_block_nhwc(x_nhwc, prepped, stride=1, *,
                        compute_dtype=jnp.bfloat16, out_dtype=None,
                        return_batch_stats=False):
    """ResidualBlock forward (training-mode BatchNorm), NHWC in / NHWC out.

    `prepped` comes from prepare_residual_block_params (hoisted weight prep).
    """
    assert stride == 1, "TODO(synk): stride > 1 path not implemented"
    N, H, W, Cin = x_nhwc.shape
    WCi = W * Cin
    WCo = prepped["w1b"].shape[2]
    Cout = WCo // W
    assert prepped["w1b"].shape == (3, WCi, WCo)
    has_downsample = "wdb" in prepped
    if not has_downsample:
        assert Cin == Cout, "identity path requires Cin == Cout"
    out_dtype = x_nhwc.dtype if out_dtype is None else out_dtype

    rows = N * H
    count = N * H * W                        # BN reduction count over (N,H,W)

    x_flat = x_nhwc.reshape(rows, WCi)       # free reshape (NHWC is contiguous)
    x_bf = x_flat.astype(compute_dtype)

    B_blk = _pick_image_block(N, H)
    BH = B_blk * H
    G = N // B_blk

    # 48 MiB scoped VMEM leaves headroom on v7x (64 MiB physical); per-step
    # blocks here are far smaller.  "parallel" grid axes let v7x's two
    # TensorCores split the work; no-op on v5e/v6e.
    cparams = pltpu.CompilerParams(
        dimension_semantics=("parallel",),
        vmem_limit_bytes=48 * 1024 * 1024,
    )

    # ---- pass 1: conv1 + partial BN1 stats (B_blk images per grid step) ----
    y1, st1 = pl.pallas_call(
        functools.partial(_pass1_kernel, H=H, n_imgs=B_blk),
        grid=(G,),
        in_specs=[
            pl.BlockSpec((BH, WCi), lambda n: (n, 0)),
            pl.BlockSpec((3, WCi, WCo), lambda n: (0, 0, 0)),
        ],
        out_specs=[
            pl.BlockSpec((BH, WCo), lambda n: (n, 0)),
            pl.BlockSpec((1, 2, WCo), lambda n: (n, 0, 0)),
        ],
        out_shape=[
            jax.ShapeDtypeStruct((rows, WCo), compute_dtype),
            jax.ShapeDtypeStruct((G, 2, WCo), jnp.float32),
        ],
        compiler_params=cparams,
    )(x_bf, prepped["w1b"])

    sc1, sh1, m1, v1 = _bn_scale_shift(st1, prepped["g1"], prepped["b1"],
                                       count, W, Cout)

    # ---- pass 2: BN1 + GELU + conv2 + partial BN2 stats ----
    y2, st2 = pl.pallas_call(
        functools.partial(_pass2_kernel, H=H, n_imgs=B_blk),
        grid=(G,),
        in_specs=[
            pl.BlockSpec((BH, WCo), lambda n: (n, 0)),
            pl.BlockSpec((1, WCo), lambda n: (0, 0)),
            pl.BlockSpec((1, WCo), lambda n: (0, 0)),
            pl.BlockSpec((3, WCo, WCo), lambda n: (0, 0, 0)),
        ],
        out_specs=[
            pl.BlockSpec((BH, WCo), lambda n: (n, 0)),
            pl.BlockSpec((1, 2, WCo), lambda n: (n, 0, 0)),
        ],
        out_shape=[
            jax.ShapeDtypeStruct((rows, WCo), compute_dtype),
            jax.ShapeDtypeStruct((G, 2, WCo), jnp.float32),
        ],
        compiler_params=cparams,
    )(y1, sc1, sh1, prepped["w2b"])

    sc2, sh2, m2, v2 = _bn_scale_shift(st2, prepped["g2"], prepped["b2"],
                                       count, W, Cout)

    # ---- pass 3: BN2 + residual + GELU (lane-dense row blocks) ----
    TR = _pick_row_tile(rows)
    G3 = rows // TR
    if has_downsample:
        out_flat = pl.pallas_call(
            _pass3_downsample_kernel,
            grid=(G3,),
            in_specs=[
                pl.BlockSpec((TR, WCo), lambda r: (r, 0)),
                pl.BlockSpec((TR, WCi), lambda r: (r, 0)),
                pl.BlockSpec((WCi, WCo), lambda r: (0, 0)),
                pl.BlockSpec((1, WCo), lambda r: (0, 0)),
                pl.BlockSpec((1, WCo), lambda r: (0, 0)),
            ],
            out_specs=pl.BlockSpec((TR, WCo), lambda r: (r, 0)),
            out_shape=jax.ShapeDtypeStruct((rows, WCo), out_dtype),
            compiler_params=cparams,
        )(y2, x_bf, prepped["wdb"], sc2, sh2)
    else:
        out_flat = pl.pallas_call(
            _pass3_identity_kernel,
            grid=(G3,),
            in_specs=[
                pl.BlockSpec((TR, WCo), lambda r: (r, 0)),
                pl.BlockSpec((TR, WCo), lambda r: (r, 0)),
                pl.BlockSpec((1, WCo), lambda r: (0, 0)),
                pl.BlockSpec((1, WCo), lambda r: (0, 0)),
            ],
            out_specs=pl.BlockSpec((TR, WCo), lambda r: (r, 0)),
            out_shape=jax.ShapeDtypeStruct((rows, WCo), out_dtype),
            compiler_params=cparams,
        )(y2, x_flat, sc2, sh2)

    out = out_flat.reshape(N, H, W, Cout)
    if return_batch_stats:
        unbias = count / max(count - 1, 1)
        stats = {"mean1": m1, "var1": v1 * unbias,
                 "mean2": m2, "var2": v2 * unbias}
        return out, stats
    return out


# --------------------------- pure-JAX reference -----------------------------
def _reference_nhwc(x, params, stride=1):
    w1, w2 = params["w1"], params["w2"]
    Cout = w1.shape[-1]
    has_downsample = (stride != 1) or (x.shape[-1] != Cout)

    def conv(a, w):
        return lax.conv_general_dilated(
            a, w, window_strides=(1, 1), padding=((1, 1), (1, 1)),
            dimension_numbers=("NHWC", "HWIO", "NHWC"))

    def bn(a, g, b):
        m = jnp.mean(a, axis=(0, 1, 2), keepdims=True)
        v = jnp.mean((a - m) ** 2, axis=(0, 1, 2), keepdims=True)
        return (a - m) * lax.rsqrt(v + _EPS) * g.reshape(1, 1, 1, -1) \
            + b.reshape(1, 1, 1, -1)

    out = _gelu_exact(bn(conv(x, w1), params["g1"], params["b1"]))
    out = bn(conv(out, w2), params["g2"], params["b2"])
    ident = jnp.einsum("nhwc,co->nhwo", x, params["wd"]) if has_downsample else x
    return _gelu_exact(out + ident)


# ------------------------------ demo / test ---------------------------------
if __name__ == "__main__":
    key = jax.random.PRNGKey(0)
    N, Cin, H, W = 2, 4, 16, 16
    Cout = 8                      # Cin != Cout -> 1x1 downsample path exercised

    ks = jax.random.split(key, 8)
    x_nchw = jax.random.normal(ks[0], (N, Cin, H, W), jnp.float32)

    # PyTorch weight layouts (OIHW), converted once to the kernel's HWIO layout.
    w1_pt = 0.1 * jax.random.normal(ks[1], (Cout, Cin, 3, 3), jnp.float32)
    w2_pt = 0.1 * jax.random.normal(ks[2], (Cout, Cout, 3, 3), jnp.float32)
    wd_pt = 0.1 * jax.random.normal(ks[3], (Cout, Cin, 1, 1), jnp.float32)

    params = {
        "w1": jnp.transpose(w1_pt, (2, 3, 1, 0)),            # (3,3,Cin,Cout)
        "w2": jnp.transpose(w2_pt, (2, 3, 1, 0)),            # (3,3,Cout,Cout)
        "wd": jnp.transpose(wd_pt[:, :, 0, 0], (1, 0)),      # (Cin,Cout)
        "g1": 1.0 + 0.1 * jax.random.normal(ks[4], (Cout,), jnp.float32),
        "b1": 0.1 * jax.random.normal(ks[5], (Cout,), jnp.float32),
        "g2": 1.0 + 0.1 * jax.random.normal(ks[6], (Cout,), jnp.float32),
        "b2": 0.1 * jax.random.normal(ks[7], (Cout,), jnp.float32),
    }

    # One-time layout conversion for the test data; the Pallas pipeline itself
    # is NHWC end-to-end (no per-call transpose round trips).
    x_nhwc = jnp.transpose(x_nchw, (0, 2, 3, 1))

    # Per-layer weight preparation (banded weights + bf16 cast) is hoisted out
    # of the jitted forward path.
    prepped = prepare_residual_block_params(params, W, stride=1)

    fwd = jax.jit(functools.partial(residual_block_nhwc, stride=1))
    y = jax.block_until_ready(fwd(x_nhwc, prepped))

    y_ref = _reference_nhwc(x_nhwc, params, stride=1)
    assert y.shape == (N, H, W, Cout)
    # Kernel uses bf16 MXU inputs with f32 accumulation; compare vs. pure-f32
    # reference with a bf16-appropriate tolerance.
    max_err = float(jnp.max(jnp.abs(y - y_ref)))
    assert bool(jnp.allclose(y, y_ref, atol=5e-2, rtol=5e-2)), (
        f"mismatch vs JAX reference: max err {max_err}")

    print("KERNEL_OK")
</pallas_src>

<mosaic_0001>
module attributes {stable_mosaic.version = 11 : i64} {
  func.func @_pass1_kernel(%arg0: i32, %arg1: memref<16x64xbf16, #tpu.memory_space<vmem>>, %arg2: memref<3x64x128xbf16, #tpu.memory_space<vmem>>, %arg3: memref<16x128xbf16, #tpu.memory_space<vmem>>, %arg4: memref<1x2x128xf32, #tpu.memory_space<vmem>>) attributes {dimension_semantics = [#tpu.dimension_semantics<parallel>], iteration_bounds = array<i64: 2>, scalar_prefetch = 0 : i64, scratch_operands = 0 : i64, tpu.core_type = #tpu.core_type<tc>, window_params = [{transform_indices = @transform_0, window_bounds = array<i64: 16, 64>}, {pipeline_mode = #tpu.pipeline_mode<synchronous>, transform_indices = @transform_1, window_bounds = array<i64: 3, 64, 128>}, {transform_indices = @transform_2, window_bounds = array<i64: 16, 128>}, {transform_indices = @transform_3, window_bounds = array<i64: 1, 2, 128>}]} {
    %c0 = arith.constant 0 : index
    %c0_0 = arith.constant 0 : index
    %0 = vector.load %arg1[%c0, %c0_0] : memref<16x64xbf16, #tpu.memory_space<vmem>>, vector<16x64xbf16>
    %cst = arith.constant 0.000000e+00 : bf16
    %1 = vector.broadcast %cst : bf16 to vector<1x64xbf16>
    %2 = vector.extract_strided_slice %0 {offsets = [0, 0], sizes = [15, 64], strides = [1, 1]} : vector<16x64xbf16> to vector<15x64xbf16>
    %3 = tpu.concatenate %1, %2 in 0 : vector<1x64xbf16>, vector<15x64xbf16> -> vector<16x64xbf16>
    %4 = vector.extract_strided_slice %0 {offsets = [1, 0], sizes = [15, 64], strides = [1, 1]} : vector<16x64xbf16> to vector<15x64xbf16>
    %5 = tpu.concatenate %4, %1 in 0 : vector<15x64xbf16>, vector<1x64xbf16> -> vector<16x64xbf16>
    %c0_1 = arith.constant 0 : index
    %c0_2 = arith.constant 0 : index
    %c0_3 = arith.constant 0 : index
    %6 = vector.load %arg2[%c0_1, %c0_2, %c0_3] : memref<3x64x128xbf16, #tpu.memory_space<vmem>>, vector<1x64x128xbf16>
    %7 = vector.shape_cast %6 : vector<1x64x128xbf16> to vector<64x128xbf16>
    %cst_4 = arith.constant dense<0.000000e+00> : vector<16x128xf32>
    %8 = tpu.matmul %3, %7, %cst_4 {dimension_numbers = #tpu.dot_dimension_numbers<[1], [0], [0], [1], [0, 0, 1, 1], [], []>} : vector<16x64xbf16>, vector<64x128xbf16>, vector<16x128xf32> -> vector<16x128xf32>
    %c1 = arith.constant 1 : index
    %c0_5 = arith.constant 0 : index
    %c0_6 = arith.constant 0 : index
    %9 = vector.load %arg2[%c1, %c0_5, %c0_6] : memref<3x64x128xbf16, #tpu.memory_space<vmem>>, vector<1x64x128xbf16>
    %10 = vector.shape_cast %9 : vector<1x64x128xbf16> to vector<64x128xbf16>
    %cst_7 = arith.constant dense<0.000000e+00> : vector<16x128xf32>
    %11 = tpu.matmul %0, %10, %cst_7 {dimension_numbers = #tpu.dot_dimension_numbers<[1], [0], [0], [1], [0, 0, 1, 1], [], []>} : vector<16x64xbf16>, vector<64x128xbf16>, vector<16x128xf32> -> vector<16x128xf32>
    %12 = arith.addf %8, %11 : vector<16x128xf32>
    %c2 = arith.constant 2 : index
    %c0_8 = arith.constant 0 : index
    %c0_9 = arith.constant 0 : index
    %13 = vector.load %arg2[%c2, %c0_8, %c0_9] : memref<3x64x128xbf16, #tpu.memory_space<vmem>>, vector<1x64x128xbf16>
    %14 = vector.shape_cast %13 : vector<1x64x128xbf16> to vector<64x128xbf16>
    %cst_10 = arith.constant dense<0.000000e+00> : vector<16x128xf32>
    %15 = tpu.matmul %5, %14, %cst_10 {dimension_numbers = #tpu.dot_dimension_numbers<[1], [0], [0], [1], [0, 0, 1, 1], [], []>} : vector<16x64xbf16>, vector<64x128xbf16>, vector<16x128xf32> -> vector<16x128xf32>
    %16 = arith.addf %12, %15 : vector<16x128xf32>
    %cst_11 = arith.constant dense<0.000000e+00> : vector<128xf32>
    %17 = vector.multi_reduction <add>, %16, %cst_11 [0] : vector<16x128xf32> to vector<128xf32>
    %18 = vector.shape_cast %17 : vector<128xf32> to vector<1x128xf32>
    %c0_12 = arith.constant 0 : index
    %c0_13 = arith.constant 0 : index
    %c0_14 = arith.constant 0 : index
    %19 = vector.load %arg4[%c0_12, %c0_13, %c0_14] : memref<1x2x128xf32, #tpu.memory_space<vmem>>, vector<1x1x128xf32>
    %20 = vector.shape_cast %19 : vector<1x1x128xf32> to vector<1x128xf32>
    %21 = vector.shape_cast %18 : vector<1x128xf32> to vector<1x1x128xf32>
    tpu.vector_store %arg4[%c0_12, %c0_13, %c0_14], %21 {strides = array<i32>} : memref<1x2x128xf32, #tpu.memory_space<vmem>>, vector<1x1x128xf32>,
    %22 = arith.mulf %16, %16 : vector<16x128xf32>
    %cst_15 = arith.constant dense<0.000000e+00> : vector<128xf32>
    %23 = vector.multi_reduction <add>, %22, %cst_15 [0] : vector<16x128xf32> to vector<128xf32>
    %24 = vector.shape_cast %23 : vector<128xf32> to vector<1x128xf32>
    %c0_16 = arith.constant 0 : index
    %c1_17 = arith.constant 1 : index
    %c0_18 = arith.constant 0 : index
    %25 = vector.load %arg4[%c0_16, %c1_17, %c0_18] : memref<1x2x128xf32, #tpu.memory_space<vmem>>, vector<1x1x128xf32>
    %26 = vector.shape_cast %25 : vector<1x1x128xf32> to vector<1x128xf32>
    %27 = vector.shape_cast %24 : vector<1x128xf32> to vector<1x1x128xf32>
    tpu.vector_store %arg4[%c0_16, %c1_17, %c0_18], %27 {strides = array<i32>} : memref<1x2x128xf32, #tpu.memory_space<vmem>>, vector<1x1x128xf32>,
    %28 = arith.truncf %16 : vector<16x128xf32> to vector<16x128xbf16>
    %c0_19 = arith.constant 0 : index
    %c0_20 = arith.constant 0 : index
    %29 = vector.load %arg3[%c0_19, %c0_20] : memref<16x128xbf16, #tpu.memory_space<vmem>>, vector<16x128xbf16>
    tpu.vector_store %arg3[%c0_19, %c0_20], %28 {strides = array<i32>} : memref<16x128xbf16, #tpu.memory_space<vmem>>, vector<16x128xbf16>,
    return
  }
  func.func @transform_0(%arg0: i32) -> (i32, i32) {
    %c0_i32 = arith.constant 0 : i32
    %c0_i32_0 = arith.constant 0 : i32
    return %arg0, %c0_i32 : i32, i32
  }
  func.func @transform_1(%arg0: i32) -> (i32, i32, i32) {
    %c0_i32 = arith.constant 0 : i32
    %c0_i32_0 = arith.constant 0 : i32
    %c0_i32_1 = arith.constant 0 : i32
    %c0_i32_2 = arith.constant 0 : i32
    return %c0_i32, %c0_i32_0, %c0_i32_1 : i32, i32, i32
  }
  func.func @transform_2(%arg0: i32) -> (i32, i32) {
    %c0_i32 = arith.constant 0 : i32
    %c0_i32_0 = arith.constant 0 : i32
    return %arg0, %c0_i32 : i32, i32
  }
  func.func @transform_3(%arg0: i32) -> (i32, i32, i32) {
    %c0_i32 = arith.constant 0 : i32
    %c0_i32_0 = arith.constant 0 : i32
    %c0_i32_1 = arith.constant 0 : i32
    return %arg0, %c0_i32, %c0_i32_0 : i32, i32, i32
  }
}

module attributes {stable_mosaic.version = 11 : i64} {
  func.func @_pass2_kernel(%arg0: i32, %arg1: memref<16x128xbf16, #tpu.memory_space<vmem>>, %arg2: memref<1x128xf32, #tpu.memory_space<vmem>>, %arg3: memref<1x128xf32, #tpu.memory_space<vmem>>, %arg4: memref<3x128x128xbf16, #tpu.memory_space<vmem>>, %arg5: memref<16x128xbf16, #tpu.memory_space<vmem>>, %arg6: memref<1x2x128xf32, #tpu.memory_space<vmem>>) attributes {dimension_semantics = [#tpu.dimension_semantics<parallel>], iteration_bounds = array<i64: 2>, scalar_prefetch = 0 : i64, scratch_operands = 0 : i64, tpu.core_type = #tpu.core_type<tc>, window_params = [{transform_indices = @transform_0, window_bounds = array<i64: 16, 128>}, {pipeline_mode = #tpu.pipeline_mode<synchronous>, transform_indices = @transform_1, window_bounds = array<i64: 1, 128>}, {pipeline_mode = #tpu.pipeline_mode<synchronous>, transform_indices = @transform_2, window_bounds = array<i64: 1, 128>}, {pipeline_mode = #tpu.pipeline_mode<synchronous>, transform_indices = @transform_3, window_bounds = array<i64: 3, 128, 128>}, {transform_indices = @transform_4, window_bounds = array<i64: 16, 128>}, {transform_indices = @transform_5, window_bounds = array<i64: 1, 2, 128>}]} {
    %c0 = arith.constant 0 : index
    %c0_0 = arith.constant 0 : index
    %0 = vector.load %arg1[%c0, %c0_0] : memref<16x128xbf16, #tpu.memory_space<vmem>>, vector<16x128xbf16>
    %1 = arith.extf %0 : vector<16x128xbf16> to vector<16x128xf32>
    %c0_1 = arith.constant 0 : index
    %c0_2 = arith.constant 0 : index
    %2 = vector.load %arg2[%c0_1, %c0_2] : memref<1x128xf32, #tpu.memory_space<vmem>>, vector<1x128xf32>
    %3 = vector.broadcast %2 : vector<1x128xf32> to vector<16x128xf32>
    %4 = arith.mulf %1, %3 : vector<16x128xf32>
    %c0_3 = arith.constant 0 : index
    %c0_4 = arith.constant 0 : index
    %5 = vector.load %arg3[%c0_3, %c0_4] : memref<1x128xf32, #tpu.memory_space<vmem>>, vector<1x128xf32>
    %6 = vector.broadcast %5 : vector<1x128xf32> to vector<16x128xf32>
    %7 = arith.addf %4, %6 : vector<16x128xf32>
    %cst = arith.constant 5.000000e-01 : f32
    %8 = vector.broadcast %cst : f32 to vector<16x128xf32>
    %9 = arith.mulf %8, %7 : vector<16x128xf32>
    %cst_5 = arith.constant 0.707106769 : f32
    %10 = vector.broadcast %cst_5 : f32 to vector<16x128xf32>
    %11 = arith.mulf %7, %10 : vector<16x128xf32>
    %12 = math.erf %11 : vector<16x128xf32>
    %cst_6 = arith.constant 1.000000e+00 : f32
    %13 = vector.broadcast %cst_6 : f32 to vector<16x128xf32>
    %14 = arith.addf %13, %12 : vector<16x128xf32>
    %15 = arith.mulf %9, %14 : vector<16x128xf32>
    %16 = arith.truncf %15 : vector<16x128xf32> to vector<16x128xbf16>
    %cst_7 = arith.constant 0.000000e+00 : bf16
    %17 = vector.broadcast %cst_7 : bf16 to vector<1x128xbf16>
    %18 = vector.extract_strided_slice %16 {offsets = [0, 0], sizes = [15, 128], strides = [1, 1]} : vector<16x128xbf16> to vector<15x128xbf16>
    %19 = tpu.concatenate %17, %18 in 0 : vector<1x128xbf16>, vector<15x128xbf16> -> vector<16x128xbf16>
    %20 = vector.extract_strided_slice %16 {offsets = [1, 0], sizes = [15, 128], strides = [1, 1]} : vector<16x128xbf16> to vector<15x128xbf16>
    %21 = tpu.concatenate %20, %17 in 0 : vector<15x128xbf16>, vector<1x128xbf16> -> vector<16x128xbf16>
    %c0_8 = arith.constant 0 : index
    %c0_9 = arith.constant 0 : index
    %c0_10 = arith.constant 0 : index
    %22 = vector.load %arg4[%c0_8, %c0_9, %c0_10] : memref<3x128x128xbf16, #tpu.memory_space<vmem>>, vector<1x128x128xbf16>
    %23 = vector.shape_cast %22 : vector<1x128x128xbf16> to vector<128x128xbf16>
    %cst_11 = arith.constant dense<0.000000e+00> : vector<16x128xf32>
    %24 = tpu.matmul %19, %23, %cst_11 {dimension_numbers = #tpu.dot_dimension_numbers<[1], [0], [0], [1], [0, 0, 1, 1], [], []>} : vector<16x128xbf16>, vector<128x128xbf16>, vector<16x128xf32> -> vector<16x128xf32>
    %c1 = arith.constant 1 : index
    %c0_12 = arith.constant 0 : index
    %c0_13 = arith.constant 0 : index
    %25 = vector.load %arg4[%c1, %c0_12, %c0_13] : memref<3x128x128xbf16, #tpu.memory_space<vmem>>, vector<1x128x128xbf16>
    %26 = vector.shape_cast %25 : vector<1x128x128xbf16> to vector<128x128xbf16>
    %cst_14 = arith.constant dense<0.000000e+00> : vector<16x128xf32>
    %27 = tpu.matmul %16, %26, %cst_14 {dimension_numbers = #tpu.dot_dimension_numbers<[1], [0], [0], [1], [0, 0, 1, 1], [], []>} : vector<16x128xbf16>, vector<128x128xbf16>, vector<16x128xf32> -> vector<16x128xf32>
    %28 = arith.addf %24, %27 : vector<16x128xf32>
    %c2 = arith.constant 2 : index
    %c0_15 = arith.constant 0 : index
    %c0_16 = arith.constant 0 : index
    %29 = vector.load %arg4[%c2, %c0_15, %c0_16] : memref<3x128x128xbf16, #tpu.memory_space<vmem>>, vector<1x128x128xbf16>
    %30 = vector.shape_cast %29 : vector<1x128x128xbf16> to vector<128x128xbf16>
    %cst_17 = arith.constant dense<0.000000e+00> : vector<16x128xf32>
    %31 = tpu.matmul %21, %30, %cst_17 {dimension_numbers = #tpu.dot_dimension_numbers<[1], [0], [0], [1], [0, 0, 1, 1], [], []>} : vector<16x128xbf16>, vector<128x128xbf16>, vector<16x128xf32> -> vector<16x128xf32>
    %32 = arith.addf %28, %31 : vector<16x128xf32>
    %cst_18 = arith.constant dense<0.000000e+00> : vector<128xf32>
    %33 = vector.multi_reduction <add>, %32, %cst_18 [0] : vector<16x128xf32> to vector<128xf32>
    %34 = vector.shape_cast %33 : vector<128xf32> to vector<1x128xf32>
    %c0_19 = arith.constant 0 : index
    %c0_20 = arith.constant 0 : index
    %c0_21 = arith.constant 0 : index
    %35 = vector.load %arg6[%c0_19, %c0_20, %c0_21] : memref<1x2x128xf32, #tpu.memory_space<vmem>>, vector<1x1x128xf32>
    %36 = vector.shape_cast %35 : vector<1x1x128xf32> to vector<1x128xf32>
    %37 = vector.shape_cast %34 : vector<1x128xf32> to vector<1x1x128xf32>
    tpu.vector_store %arg6[%c0_19, %c0_20, %c0_21], %37 {strides = array<i32>} : memref<1x2x128xf32, #tpu.memory_space<vmem>>, vector<1x1x128xf32>,
    %38 = arith.mulf %32, %32 : vector<16x128xf32>
    %cst_22 = arith.constant dense<0.000000e+00> : vector<128xf32>
    %39 = vector.multi_reduction <add>, %38, %cst_22 [0] : vector<16x128xf32> to vector<128xf32>
    %40 = vector.shape_cast %39 : vector<128xf32> to vector<1x128xf32>
    %c0_23 = arith.constant 0 : index
    %c1_24 = arith.constant 1 : index
    %c0_25 = arith.constant 0 : index
    %41 = vector.load %arg6[%c0_23, %c1_24, %c0_25] : memref<1x2x128xf32, #tpu.memory_space<vmem>>, vector<1x1x128xf32>
    %42 = vector.shape_cast %41 : vector<1x1x128xf32> to vector<1x128xf32>
    %43 = vector.shape_cast %40 : vector<1x128xf32> to vector<1x1x128xf32>
    tpu.vector_store %arg6[%c0_23, %c1_24, %c0_25], %43 {strides = array<i32>} : memref<1x2x128xf32, #tpu.memory_space<vmem>>, vector<1x1x128xf32>,
    %44 = arith.truncf %32 : vector<16x128xf32> to vector<16x128xbf16>
    %c0_26 = arith.constant 0 : index
    %c0_27 = arith.constant 0 : index
    %45 = vector.load %arg5[%c0_26, %c0_27] : memref<16x128xbf16, #tpu.memory_space<vmem>>, vector<16x128xbf16>
    tpu.vector_store %arg5[%c0_26, %c0_27], %44 {strides = array<i32>} : memref<16x128xbf16, #tpu.memory_space<vmem>>, vector<16x128xbf16>,
    return
  }
  func.func @transform_0(%arg0: i32) -> (i32, i32) {
    %c0_i32 = arith.constant 0 : i32
    %c0_i32_0 = arith.constant 0 : i32
    return %arg0, %c0_i32 : i32, i32
  }
  func.func @transform_1(%arg0: i32) -> (i32, i32) {
    %c0_i32 = arith.constant 0 : i32
    %c0_i32_0 = arith.constant 0 : i32
    %c0_i32_1 = arith.constant 0 : i32
    return %c0_i32, %c0_i32_0 : i32, i32
  }
  func.func @transform_2(%arg0: i32) -> (i32, i32) {
    %c0_i32 = arith.constant 0 : i32
    %c0_i32_0 = arith.constant 0 : i32
    %c0_i32_1 = arith.constant 0 : i32
    return %c0_i32, %c0_i32_0 : i32, i32
  }
  func.func @transform_3(%arg0: i32) -> (i32, i32, i32) {
    %c0_i32 = arith.constant 0 : i32
    %c0_i32_0 = arith.constant 0 : i32
    %c0_i32_1 = arith.constant 0 : i32
    %c0_i32_2 = arith.constant 0 : i32
    return %c0_i32, %c0_i32_0, %c0_i32_1 : i32, i32, i32
  }
  func.func @transform_4(%arg0: i32) -> (i32, i32) {
    %c0_i32 = arith.constant 0 : i32
    %c0_i32_0 = arith.constant 0 : i32
    return %arg0, %c0_i32 : i32, i32
  }
  func.func @transform_5(%arg0: i32) -> (i32, i32, i32) {
    %c0_i32 = arith.constant 0 : i32
    %c0_i32_0 = arith.constant 0 : i32
    %c0_i32_1 = arith.constant 0 : i32
    return %arg0, %c0_i32, %c0_i32_0 : i32, i32, i32
  }
}

module attributes {stable_mosaic.version = 11 : i64} {
  func.func @_pass3_downsample_kernel(%arg0: i32, %arg1: memref<16x128xbf16, #tpu.memory_space<vmem>>, %arg2: memref<16x64xbf16, #tpu.memory_space<vmem>>, %arg3: memref<64x128xbf16, #tpu.memory_space<vmem>>, %arg4: memref<1x128xf32, #tpu.memory_space<vmem>>, %arg5: memref<1x128xf32, #tpu.memory_space<vmem>>, %arg6: memref<16x128xf32, #tpu.memory_space<vmem>>) attributes {dimension_semantics = [#tpu.dimension_semantics<parallel>], iteration_bounds = array<i64: 2>, scalar_prefetch = 0 : i64, scratch_operands = 0 : i64, tpu.core_type = #tpu.core_type<tc>, window_params = [{transform_indices = @transform_0, window_bounds = array<i64: 16, 128>}, {transform_indices = @transform_1, window_bounds = array<i64: 16, 64>}, {pipeline_mode = #tpu.pipeline_mode<synchronous>, transform_indices = @transform_2, window_bounds = array<i64: 64, 128>}, {pipeline_mode = #tpu.pipeline_mode<synchronous>, transform_indices = @transform_3, window_bounds = array<i64: 1, 128>}, {pipeline_mode = #tpu.pipeline_mode<synchronous>, transform_indices = @transform_4, window_bounds = array<i64: 1, 128>}, {transform_indices = @transform_5, window_bounds = array<i64: 16, 128>}]} {
    %c0 = arith.constant 0 : index
    %c0_0 = arith.constant 0 : index
    %0 = vector.load %arg2[%c0, %c0_0] : memref<16x64xbf16, #tpu.memory_space<vmem>>, vector<16x64xbf16>
    %c0_1 = arith.constant 0 : index
    %c0_2 = arith.constant 0 : index
    %1 = vector.load %arg3[%c0_1, %c0_2] : memref<64x128xbf16, #tpu.memory_space<vmem>>, vector<64x128xbf16>
    %cst = arith.constant dense<0.000000e+00> : vector<16x128xf32>
    %2 = tpu.matmul %0, %1, %cst {dimension_numbers = #tpu.dot_dimension_numbers<[1], [0], [0], [1], [0, 0, 1, 1], [], []>} : vector<16x64xbf16>, vector<64x128xbf16>, vector<16x128xf32> -> vector<16x128xf32>
    %c0_3 = arith.constant 0 : index
    %c0_4 = arith.constant 0 : index
    %3 = vector.load %arg1[%c0_3, %c0_4] : memref<16x128xbf16, #tpu.memory_space<vmem>>, vector<16x128xbf16>
    %4 = arith.extf %3 : vector<16x128xbf16> to vector<16x128xf32>
    %c0_5 = arith.constant 0 : index
    %c0_6 = arith.constant 0 : index
    %5 = vector.load %arg4[%c0_5, %c0_6] : memref<1x128xf32, #tpu.memory_space<vmem>>, vector<1x128xf32>
    %6 = vector.broadcast %5 : vector<1x128xf32> to vector<16x128xf32>
    %7 = arith.mulf %4, %6 : vector<16x128xf32>
    %c0_7 = arith.constant 0 : index
    %c0_8 = arith.constant 0 : index
    %8 = vector.load %arg5[%c0_7, %c0_8] : memref<1x128xf32, #tpu.memory_space<vmem>>, vector<1x128xf32>
    %9 = vector.broadcast %8 : vector<1x128xf32> to vector<16x128xf32>
    %10 = arith.addf %7, %9 : vector<16x128xf32>
    %11 = arith.addf %10, %2 : vector<16x128xf32>
    %cst_9 = arith.constant 5.000000e-01 : f32
    %12 = vector.broadcast %cst_9 : f32 to vector<16x128xf32>
    %13 = arith.mulf %12, %11 : vector<16x128xf32>
    %cst_10 = arith.constant 0.707106769 : f32
    %14 = vector.broadcast %cst_10 : f32 to vector<16x128xf32>
    %15 = arith.mulf %11, %14 : vector<16x128xf32>
    %16 = math.erf %15 : vector<16x128xf32>
    %cst_11 = arith.constant 1.000000e+00 : f32
    %17 = vector.broadcast %cst_11 : f32 to vector<16x128xf32>
    %18 = arith.addf %17, %16 : vector<16x128xf32>
    %19 = arith.mulf %13, %18 : vector<16x128xf32>
    %c0_12 = arith.constant 0 : index
    %c0_13 = arith.constant 0 : index
    %20 = vector.load %arg6[%c0_12, %c0_13] : memref<16x128xf32, #tpu.memory_space<vmem>>, vector<16x128xf32>
    tpu.vector_store %arg6[%c0_12, %c0_13], %19 {strides = array<i32>} : memref<16x128xf32, #tpu.memory_space<vmem>>, vector<16x128xf32>,
    return
  }
  func.func @transform_0(%arg0: i32) -> (i32, i32) {
    %c0_i32 = arith.constant 0 : i32
    %c0_i32_0 = arith.constant 0 : i32
    return %arg0, %c0_i32 : i32, i32
  }
  func.func @transform_1(%arg0: i32) -> (i32, i32) {
    %c0_i32 = arith.constant 0 : i32
    %c0_i32_0 = arith.constant 0 : i32
    return %arg0, %c0_i32 : i32, i32
  }
  func.func @transform_2(%arg0: i32) -> (i32, i32) {
    %c0_i32 = arith.constant 0 : i32
    %c0_i32_0 = arith.constant 0 : i32
    %c0_i32_1 = arith.constant 0 : i32
    return %c0_i32, %c0_i32_0 : i32, i32
  }
  func.func @transform_3(%arg0: i32) -> (i32, i32) {
    %c0_i32 = arith.constant 0 : i32
    %c0_i32_0 = arith.constant 0 : i32
    %c0_i32_1 = arith.constant 0 : i32
    return %c0_i32, %c0_i32_0 : i32, i32
  }
  func.func @transform_4(%arg0: i32) -> (i32, i32) {
    %c0_i32 = arith.constant 0 : i32
    %c0_i32_0 = arith.constant 0 : i32
    %c0_i32_1 = arith.constant 0 : i32
    return %c0_i32, %c0_i32_0 : i32, i32
  }
  func.func @transform_5(%arg0: i32) -> (i32, i32) {
    %c0_i32 = arith.constant 0 : i32
    %c0_i32_0 = arith.constant 0 : i32
    return %arg0, %c0_i32 : i32, i32
  }
}

</mosaic_0001>

<llo_original>
// kernel: tile.29
$region0: #{tile.29}
  %s0 = inlined_call_operand.vmem [shape: f32[16,8], index: 0, kind: input, shape index: {}]
  %s1 = inlined_call_operand.vmem [shape: f32[1,128], index: 1, kind: output, shape index: {}]
  $region1: #{tile.29} parent=0
    #allocation0 [shape = 'u8[4096]{0}', space=vmem, size = 0x1000, scoped, tag = 'scoped mem for output reshape']
    %v2 = vld [vmem:[%s0] sm:$0x1]
    %vm3 = vcmask 64512
    %4 = vst.msk [vmem:[#allocation0] sm:$0x1] %vm3, %v2
    %s5 = scalar_lea.vmem %s0, 15
    %v6 = vld [vmem:[%s5] sm:$0x1]
    %7 = vrot.lane.b32.xlu0 %v6, 120
    %v8 = vpop.permute.xlu0 %7
    %vm9 = vcmask 1048512
    %10 = vst.msk [vmem:[#allocation0] sm:$0x1] %vm9, %v8
    %s11 = scalar_lea.vmem %s0, 14
    %v12 = vld [vmem:[%s11] sm:$0x1]
    %13 = vrot.lane.b32.xlu0 %v12, 112
    %v14 = vpop.permute.xlu0 %13
    %vm15 = vcmask 982912
    %16 = vst.msk [vmem:[#allocation0] sm:$0x1] %vm15, %v14
    %s17 = scalar_lea.vmem %s0, 13
    %v18 = vld [vmem:[%s17] sm:$0x1]
    %19 = vrot.lane.b32.xlu0 %v18, 104
    %v20 = vpop.permute.xlu0 %19
    %vm21 = vcmask 917312
    %22 = vst.msk [vmem:[#allocation0] sm:$0x1] %vm21, %v20
    %s23 = scalar_lea.vmem %s0, 12
    %v24 = vld [vmem:[%s23] sm:$0x1]
    %25 = vrot.lane.b32.xlu0 %v24, 96
    %v26 = vpop.permute.xlu0 %25
    %vm27 = vcmask 851712
    %28 = vst.msk [vmem:[#allocation0] sm:$0x1] %vm27, %v26
    %s29 = scalar_lea.vmem %s0, 11
    %v30 = vld [vmem:[%s29] sm:$0x1]
    %31 = vrot.lane.b32.xlu0 %v30, 88
    %v32 = vpop.permute.xlu0 %31
    %vm33 = vcmask 786112
    %34 = vst.msk [vmem:[#allocation0] sm:$0x1] %vm33, %v32
    %s35 = scalar_lea.vmem %s0, 10
    %v36 = vld [vmem:[%s35] sm:$0x1]
    %37 = vrot.lane.b32.xlu0 %v36, 80
    %v38 = vpop.permute.xlu0 %37
    %vm39 = vcmask 720512
    %40 = vst.msk [vmem:[#allocation0] sm:$0x1] %vm39, %v38
    %s41 = scalar_lea.vmem %s0, 9
    %v42 = vld [vmem:[%s41] sm:$0x1]
    %43 = vrot.lane.b32.xlu0 %v42, 72
    %v44 = vpop.permute.xlu0 %43
    %vm45 = vcmask 654912
    %46 = vst.msk [vmem:[#allocation0] sm:$0x1] %vm45, %v44
    %s47 = scalar_lea.vmem %s0, 8
    %v48 = vld [vmem:[%s47] sm:$0x1]
    %49 = vrot.lane.b32.xlu0 %v48, 64
    %v50 = vpop.permute.xlu0 %49
    %vm51 = vcmask 589312
    %52 = vst.msk [vmem:[#allocation0] sm:$0x1] %vm51, %v50
    %s53 = scalar_lea.vmem %s0, 7
    %v54 = vld [vmem:[%s53] sm:$0x1]
    %55 = vrot.lane.b32.xlu0 %v54, 56
    %v56 = vpop.permute.xlu0 %55
    %vm57 = vcmask 523712
    %58 = vst.msk [vmem:[#allocation0] sm:$0x1] %vm57, %v56
    %s59 = scalar_lea.vmem %s0, 6
    %v60 = vld [vmem:[%s59] sm:$0x1]
    %61 = vrot.lane.b32.xlu0 %v60, 48
    %v62 = vpop.permute.xlu0 %61
    %vm63 = vcmask 458112
    %64 = vst.msk [vmem:[#allocation0] sm:$0x1] %vm63, %v62
    %s65 = scalar_lea.vmem %s0, 5
    %v66 = vld [vmem:[%s65] sm:$0x1]
    %67 = vrot.lane.b32.xlu0 %v66, 40
    %v68 = vpop.permute.xlu0 %67
    %vm69 = vcmask 392512
    %70 = vst.msk [vmem:[#allocation0] sm:$0x1] %vm69, %v68
    %s71 = scalar_lea.vmem %s0, 4
    %v72 = vld [vmem:[%s71] sm:$0x1]
    %73 = vrot.lane.b32.xlu0 %v72, 32
    %v74 = vpop.permute.xlu0 %73
    %vm75 = vcmask 326912
    %76 = vst.msk [vmem:[#allocation0] sm:$0x1] %vm75, %v74
    %s77 = scalar_lea.vmem %s0, 3
    %v78 = vld [vmem:[%s77] sm:$0x1]
    %79 = vrot.lane.b32.xlu0 %v78, 24
    %v80 = vpop.permute.xlu0 %79
    %vm81 = vcmask 261312
    %82 = vst.msk [vmem:[#allocation0] sm:$0x1] %vm81, %v80
    %s83 = scalar_lea.vmem %s0, 2
    %v84 = vld [vmem:[%s83] sm:$0x1]
    %85 = vrot.lane.b32.xlu0 %v84, 16
    %v86 = vpop.permute.xlu0 %85
    %vm87 = vcmask 195712
    %88 = vst.msk [vmem:[#allocation0] sm:$0x1] %vm87, %v86
    %s89 = scalar_lea.vmem %s0, 1
    %v90 = vld [vmem:[%s89] sm:$0x1]
    %91 = vrot.lane.b32.xlu0 %v90, 8
    %v92 = vpop.permute.xlu0 %91
    %vm93 = vcmask 130112
    %94 = vst.msk [vmem:[#allocation0] sm:$0x1] %vm93, %v92
    %s96 = ssub.s32 2, 1
    %v97 = vld [vmem:[#allocation0] sm:%s96]
    %s99 = ssub.s32 2, 1
    %100 = vst [vmem:[%s1] sm:%s99] %v97

// kernel: tile.28
$region0: #{tile.28}
  #allocation0 [shape = 's32[1]{0}', space=sflag, size = 0x4, scoped, tag = 'scoped memory for tile.28']
  %s0 = inlined_call_operand.vmem [shape: f32[8], index: 0, kind: input, shape index: {}]
  %s1 = inlined_call_operand.vmem [shape: f32[16,8], index: 1, kind: output, shape index: {}]
  // Predicated region
  $region2: #{tile.28} parent=0 // pred_check
    _
  $region3: #{tile.28} parent=0 // pred_check_branch
    %3 = sbr.rel (0) target = $region5
  $region4: #{tile.28} parent=0 // pred_region
    _
  $region5: #{tile.28} parent=0 // pred_fallthru
    _
  %v4 = vld [vmem:[%s0] ss:$0 sm:$0xff]
  %5 = vst [vmem:[%s1] sm:$0xff] %v4
  %s6 = scalar_lea.vmem %s1, 8
  %7 = vst [vmem:[%s6] sm:$0xff] %v4

// kernel: residual_block_nhwc.3
$region0: #{residual_block_nhwc.3}
  #allocation0 [shape = 'u32[]', space=smem, size = 0x4, offset = 0x4, fixed_abs, tag = 'smem constant byte address 0x4 - core index']
  #allocation1 [shape = 'u32[72,128]{1,0:T(1,128)}', space=vmem, size = 0x9000, scoped, tag = 'internal scratch']
  %s0 = inlined_call_operand.vmem [shape: bf16[32,64], index: 0, kind: input, shape index: {}]
  %s1 = inlined_call_operand.vmem [shape: bf16[3,64,128], index: 1, kind: input, shape index: {}]
  %s2 = inlined_call_operand.vmem [shape: bf16[32,128], index: 2, kind: output, shape index: {0}]
  %s3 = inlined_call_operand.vmem [shape: f32[2,2,128], index: 3, kind: output, shape index: {1}]
  %4 = xla_tuple %s2, %s3
  %s5 = sld [smem:[#allocation0]]
  $region49: #{residual_block_nhwc.3} parent=0
    _
  %s7 = ssub.s32 1, %s5
  %s8 = scalar_select 0, %s7, %s5
  loop: start=0, step=1, limit=4
  $region2: #{residual_block_nhwc.3} parent=0 // loop_pre_header
    _
  $region3: #{residual_block_nhwc.3} parent=0 // loop_header
    %s10 = sphi 0, %s14
    %p11 = scmp.ge.s32.totalorder %s10, 4
    %s20 = sphi 0, %s22
    %s23 = sphi 0, %s20
    %s24 = sphi 0, %s23
    %s40 = sphi 0, %s24
    %s44 = sphi 0, %s44
    %s46 = sphi 0, %s44
    %s47 = sphi 0, %s46
    %s61 = sphi 0, %s47
    %s67 = sphi 0, %s69
    %s70 = sphi 0, %s67
    %s71 = sphi 0, %s70
    %s87 = sphi 0, %s71
    %s93 = sphi 0, %s95
    %s96 = sphi 0, %s93
    %s97 = sphi 0, %s96
    %s113 = sphi 0, %s97
  $region4: #{residual_block_nhwc.3} parent=0 // loop_header_branch
    %13 = sbr.rel (%p11) target = $region8
  $region5: #{residual_block_nhwc.3} parent=0 // loop_body
    %s15 = ssub.s32 %s10, 1
    %s16 = ssub.s32 %s10, 2
    %s17 = sadd.s32 %s10, 1
    %s18 = ssub.s32 %s10, %s17
    %p19 = scmp.eq.s32.totalorder %s18, 0
    %s21 = sadd.s32 %s20, 1
    %s22 = scalar_select %p19, %s20, %s21
    %p25 = pneg %p19
    %p26 = scmp.eq.s32.totalorder %s10, 1
    %p27 = por %p25, %p26
    %p28 = scmp.ne.s32.totalorder %s20, %s23
    %p29 = scmp.eq.s32.totalorder %s10, 0
    %p30 = por %p28, %p29
    %p31 = scmp.ne.s32.totalorder %s20, %s23
    %p32 = scmp.eq.s32.totalorder %s15, 1
    %p33 = por %p31, %p32
    %p34 = scmp.ne.s32.totalorder %s23, %s24
    %p35 = scmp.eq.s32.totalorder %s15, 0
    %p36 = por %p34, %p35
    %p37 = scmp.ne.s32.totalorder %s23, %s24
    %p38 = scmp.eq.s32.totalorder %s16, 1
    %p39 = por %p37, %p38
    %p41 = scmp.ne.s32.totalorder %s24, %s40
    %p42 = scmp.eq.s32.totalorder %s16, 0
    %p43 = por %p41, %p42
    %s45 = sadd.s32 %s44, 1
    %p48 = scmp.eq.s32.totalorder %s10, 1
    %p49 = scmp.ne.s32.totalorder %s44, %s46
    %p50 = scmp.eq.s32.totalorder %s10, 0
    %p51 = por %p49, %p50
    %p52 = scmp.ne.s32.totalorder %s44, %s46
    %p53 = scmp.eq.s32.totalorder %s15, 1
    %p54 = por %p52, %p53
    %p55 = scmp.ne.s32.totalorder %s46, %s47
    %p56 = scmp.eq.s32.totalorder %s15, 0
    %p57 = por %p55, %p56
    %p58 = scmp.ne.s32.totalorder %s46, %s47
    %p59 = scmp.eq.s32.totalorder %s16, 1
    %p60 = por %p58, %p59
    %p62 = scmp.ne.s32.totalorder %s47, %s61
    %p63 = scmp.eq.s32.totalorder %s16, 0
    %p64 = por %p62, %p63
    %s65 = ssub.s32 %s10, %s17
    %p66 = scmp.eq.s32.totalorder %s65, 0
    %s68 = sadd.s32 %s67, 1
    %s69 = scalar_select %p66, %s67, %s68
    %p72 = pneg %p66
    %p73 = scmp.eq.s32.totalorder %s10, 1
    %p74 = por %p72, %p73
    %p75 = scmp.ne.s32.totalorder %s67, %s70
    %p76 = scmp.eq.s32.totalorder %s10, 0
    %p77 = por %p75, %p76
    %p78 = scmp.ne.s32.totalorder %s67, %s70
    %p79 = scmp.eq.s32.totalorder %s15, 1
    %p80 = por %p78, %p79
    %p81 = scmp.ne.s32.totalorder %s70, %s71
    %p82 = scmp.eq.s32.totalorder %s15, 0
    %p83 = por %p81, %p82
    %p84 = scmp.ne.s32.totalorder %s70, %s71
    %p85 = scmp.eq.s32.totalorder %s16, 1
    %p86 = por %p84, %p85
    %p88 = scmp.ne.s32.totalorder %s71, %s87
    %p89 = scmp.eq.s32.totalorder %s16, 0
    %p90 = por %p88, %p89
    %s91 = ssub.s32 %s10, %s17
    %p92 = scmp.eq.s32.totalorder %s91, 0
    %s94 = sadd.s32 %s93, 1
    %s95 = scalar_select %p92, %s93, %s94
    %p98 = pneg %p92
    %p99 = scmp.eq.s32.totalorder %s10, 1
    %p100 = por %p98, %p99
    %p101 = scmp.ne.s32.totalorder %s93, %s96
    %p102 = scmp.eq.s32.totalorder %s10, 0
    %p103 = por %p101, %p102
    %p104 = scmp.ne.s32.totalorder %s93, %s96
    %p105 = scmp.eq.s32.totalorder %s15, 1
    %p106 = por %p104, %p105
    %p107 = scmp.ne.s32.totalorder %s96, %s97
    %p108 = scmp.eq.s32.totalorder %s15, 0
    %p109 = por %p107, %p108
    %p110 = scmp.ne.s32.totalorder %s96, %s97
    %p111 = scmp.eq.s32.totalorder %s16, 1
    %p112 = por %p110, %p111
    %p114 = scmp.ne.s32.totalorder %s97, %s113
    %p115 = scmp.eq.s32.totalorder %s16, 0
    %p116 = por %p114, %p115
    %p117 = scmp.le.s32.totalorder 1, %s10
    %p118 = scmp.lt.s32.totalorder %s10, 3
    %p119 = pnand %p117, %p118
    %p120 = pneg %p119
    // Predicated region
    $region9: #{residual_block_nhwc.3} parent=5 // pred_check
      _
    $region10: #{residual_block_nhwc.3} parent=5 // pred_check_branch
      %122 = sbr.rel (%p119) target = $region12
    $region11: #{residual_block_nhwc.3} parent=5 // pred_region
      %s123 = ssub.s32 %s10, 1
      // Predicated region
      $region13: #{residual_block_nhwc.3} parent=11 // pred_check
        %p124 = pneg %p57
      $region14: #{residual_block_nhwc.3} parent=11 // pred_check_branch
        %126 = sbr.rel (%p124) target = $region16
      $region15: #{residual_block_nhwc.3} parent=11 // pred_region
        _
      $region16: #{residual_block_nhwc.3} parent=11 // pred_fallthru
        _
    $region12: #{residual_block_nhwc.3} parent=5 // pred_fallthru
      _
    %p127 = scmp.lt.s32.totalorder %s10, 2
    // Predicated region
    $region17: #{residual_block_nhwc.3} parent=5 // pred_check
      %p128 = pneg %p127
    $region18: #{residual_block_nhwc.3} parent=5 // pred_check_branch
      %130 = sbr.rel (%p128) target = $region20
    $region19: #{residual_block_nhwc.3} parent=5 // pred_region
      // Predicated region
      $region21: #{residual_block_nhwc.3} parent=19 // pred_check
        %p131 = pneg %p30
      $region22: #{residual_block_nhwc.3} parent=19 // pred_check_branch
        %133 = sbr.rel (%p131) target = $region24
      $region23: #{residual_block_nhwc.3} parent=19 // pred_region
        %s134 = smul.u32 2, %s10
        %p135 = scmp.lt.s32.totalorder %s134, 3
        %s136 = scalar_select %p135, %s134, 3
        %s137 = smul.addr %s136, 4
        %s138 = scalar_lea.vmem %s0, %s137
        %s139 = smul.u32 2, %s10
      $region24: #{residual_block_nhwc.3} parent=19 // pred_fallthru
        _
    $region20: #{residual_block_nhwc.3} parent=5 // pred_fallthru
      _
    %p140 = scmp.le.s32.totalorder 1, %s10
    %p141 = scmp.lt.s32.totalorder %s10, 3
    %p142 = pnand %p140, %p141
    %p143 = pneg %p142
    // Predicated region
    $region25: #{residual_block_nhwc.3} parent=5 // pred_check
      _
    $region26: #{residual_block_nhwc.3} parent=5 // pred_check_branch
      %145 = sbr.rel (%p142) target = $region28
    $region27: #{residual_block_nhwc.3} parent=5 // pred_region
      %s146 = ssub.s32 %s10, 1
      %s147 = smul.u32 2, %s15
      %p148 = scmp.lt.s32.totalorder %s147, 3
      %s149 = scalar_select %p148, %s147, 3
      %s150 = smul.addr %s149, 4
      %s151 = scalar_lea.vmem %s0, %s150
      %p152 = pneg %p36
      %p153 = pneg %p33
      %p154 = pneg %p57
      %p155 = pneg %p54
      %p156 = pneg %p83
      %p157 = pneg %p80
      %s158 = smul.u32 2, %s15
      %p159 = scmp.lt.s32.totalorder %s158, 3
      %s160 = scalar_select %p159, %s158, 3
      %s161 = smul.addr %s160, 4
      %s162 = scalar_lea.vmem %s2, %s161
      %p163 = pneg %p109
      %p164 = pneg %p106
      %p165 = scmp.lt.s32.totalorder %s15, 1
      %s166 = scalar_select %p165, %s15, 1
      %s167 = smul.addr %s166, 2
      %s168 = scalar_lea.vmem %s3, %s167
      %s169 = smul.u32 2, %s15
      %p170 = scmp.lt.s32.totalorder %s169, 3
      %s171 = scalar_select %p170, %s169, 3
      %s172 = smul.addr %s171, 4
      %s173 = scalar_lea.vmem %s0, %s172
      %s174 = smul.u32 2, %s15
      %s175 = smul.u32 2, %s15
      %p176 = scmp.lt.s32.totalorder %s175, 3
      %s177 = scalar_select %p176, %s175, 3
      %s178 = smul.addr %s177, 4
      %s179 = scalar_lea.vmem %s2, %s178
      %s180 = smul.u32 2, %s15
      %p181 = scmp.lt.s32.totalorder %s15, 1
      %s182 = scalar_select %p181, %s15, 1
      %s183 = smul.addr %s182, 2
      %s184 = scalar_lea.vmem %s3, %s183
      %v186 = vld [vmem:[%s173] sm:$0xf]
      %v187 = vld [vmem:[%s173 + $0x4] sm:$0xf]
      %v190 = vunpack.c.l.b16 %v186
      %v191 = vunpack.c.l.b16 %v187
      %v192 = vpack.c.b16 %v191, %v190
      %v194 = vshrl.u32 %v192, 16
      %v196 = vrot.slane %v194, 7
      %v197 = vshll.u32 %v192, 16
      %v199 = vor.u32 %v196, %v197
      %vm201 = vcmask 1040384
      %vm202 = vsmask.f32 256
      %vm203 = vmand %vm201, %vm202
      %v204 = vsel %vm203, 0, %v199
      %v205 = vrot.slane %v197, 1
      %v206 = vor.u32 %v194, %v205
      %vm208 = vcmask 1047552
      %vm209 = vsmask.f32 7424
      %vm210 = vmand %vm208, %vm209
      %v211 = vsel %vm210, %v206, 0
      %v212 = vld [vmem:[%s1] sm:$0xf]
      %v213 = vld [vmem:[%s1 + $0x4] sm:$0xf]
      %v214 = vld [vmem:[%s1 + $0x8] sm:$0xf]
      %v215 = vld [vmem:[%s1 + $0xc] sm:$0xf]
      %v216 = vld [vmem:[%s1 + $0x10] sm:$0xf]
      %v217 = vld [vmem:[%s1 + $0x14] sm:$0xf]
      %v218 = vld [vmem:[%s1 + $0x18] sm:$0xf]
      %v219 = vld [vmem:[%s1 + $0x1c] sm:$0xf]
      %s220 = scalar_lea.vmem %s1, 32
      %v221 = vld [vmem:[%s220] sm:$0xf]
      %v222 = vld [vmem:[%s220 + $0x4] sm:$0xf]
      %v223 = vld [vmem:[%s220 + $0x8] sm:$0xf]
      %v224 = vld [vmem:[%s220 + $0xc] sm:$0xf]
      %v225 = vld [vmem:[%s220 + $0x10] sm:$0xf]
      %v226 = vld [vmem:[%s220 + $0x14] sm:$0xf]
      %v227 = vld [vmem:[%s220 + $0x18] sm:$0xf]
      %v228 = vld [vmem:[%s220 + $0x1c] sm:$0xf]
      %v237 = vunpack.c.l.b16 %v221
      %v238 = vunpack.c.l.b16 %v222
      %v239 = vunpack.c.l.b16 %v223
      %v240 = vunpack.c.l.b16 %v224
      %v241 = vunpack.c.l.b16 %v225
      %v242 = vunpack.c.l.b16 %v226
      %v243 = vunpack.c.l.b16 %v227
      %v244 = vunpack.c.l.b16 %v228
      %v245 = vpack.c.b16 %v238, %v237
      %v246 = vpack.c.b16 %v240, %v239
      %v247 = vpack.c.b16 %v242, %v241
      %v248 = vpack.c.b16 %v244, %v243
      %vm253 = vcmask 523264
      %v254 = vsel %vm253, %v192, 0
      %256 = vmatpush.bf16.msra.mxu0 0
      %257 = vmatpush.bf16.msra.mxu0 0
      %258 = vmatpush.bf16.msra.mxu0 0
      %259 = vmatpush.bf16.msra.mxu0 0
      %260 = vmatpush.bf16.msra.mxu0 %v248
      %261 = vmatpush.bf16.msra.mxu0 %v247
      %262 = vmatpush.bf16.msra.mxu0 %v246
      %263 = vmatpush.bf16.msra.mxu0 %v245
      %264 = vmatmul.bf16.gmra.mxu0 %v254
      %v265 = vpop.f32.mrf.mxu0
      %v266 = vadd.f32 0.0, %v265
      %v267 = vpop.f32.mrf.mxu0
      %v268 = vadd.f32 0.0, %v267
      %269 = vdwg.mxu0
      %v278 = vunpack.c.l.b16 %v212
      %v279 = vunpack.c.l.b16 %v213
      %v280 = vunpack.c.l.b16 %v214
      %v281 = vunpack.c.l.b16 %v215
      %v282 = vunpack.c.l.b16 %v216
      %v283 = vunpack.c.l.b16 %v217
      %v284 = vunpack.c.l.b16 %v218
      %v285 = vunpack.c.l.b16 %v219
      %v286 = vpack.c.b16 %v279, %v278
      %v287 = vpack.c.b16 %v281, %v280
      %v288 = vpack.c.b16 %v283, %v282
      %v289 = vpack.c.b16 %v285, %v284
      %v295 = vsel %vm253, %v204, 0
      %297 = vmatpush.bf16.msra.mxu0 0
      %298 = vmatpush.bf16.msra.mxu0 0
      %299 = vmatpush.bf16.msra.mxu0 0
      %300 = vmatpush.bf16.msra.mxu0 0
      %301 = vmatpush.bf16.msra.mxu0 %v289
      %302 = vmatpush.bf16.msra.mxu0 %v288
      %303 = vmatpush.bf16.msra.mxu0 %v287
      %304 = vmatpush.bf16.msra.mxu0 %v286
      %305 = vmatmul.bf16.gmra.mxu0 %v295
      %v306 = vpop.f32.mrf.mxu0
      %v307 = vadd.f32 %v266, %v306
      %v308 = vpop.f32.mrf.mxu0
      %v309 = vadd.f32 %v268, %v308
      %310 = vdwg.mxu0
      %s311 = scalar_lea.vmem %s1, 64
      %v312 = vld [vmem:[%s311] sm:$0xf]
      %v313 = vld [vmem:[%s311 + $0x4] sm:$0xf]
      %v314 = vld [vmem:[%s311 + $0x8] sm:$0xf]
      %v315 = vld [vmem:[%s311 + $0xc] sm:$0xf]
      %v316 = vld [vmem:[%s311 + $0x10] sm:$0xf]
      %v317 = vld [vmem:[%s311 + $0x14] sm:$0xf]
      %v318 = vld [vmem:[%s311 + $0x18] sm:$0xf]
      %v319 = vld [vmem:[%s311 + $0x1c] sm:$0xf]
      %v328 = vunpack.c.l.b16 %v312
      %v329 = vunpack.c.l.b16 %v313
      %v330 = vunpack.c.l.b16 %v314
      %v331 = vunpack.c.l.b16 %v315
      %v332 = vunpack.c.l.b16 %v316
      %v333 = vunpack.c.l.b16 %v317
      %v334 = vunpack.c.l.b16 %v318
      %v335 = vunpack.c.l.b16 %v319
      %v336 = vpack.c.b16 %v329, %v328
      %v337 = vpack.c.b16 %v331, %v330
      %v338 = vpack.c.b16 %v333, %v332
      %v339 = vpack.c.b16 %v335, %v334
      %v345 = vsel %vm253, %v211, 0
      %347 = vmatpush.bf16.msra.mxu0 0
      %348 = vmatpush.bf16.msra.mxu0 0
      %349 = vmatpush.bf16.msra.mxu0 0
      %350 = vmatpush.bf16.msra.mxu0 0
      %351 = vmatpush.bf16.msra.mxu0 %v339
      %352 = vmatpush.bf16.msra.mxu0 %v338
      %353 = vmatpush.bf16.msra.mxu0 %v337
      %354 = vmatpush.bf16.msra.mxu0 %v336
      %355 = vmatmul.bf16.gmra.mxu0 %v345
      %v356 = vpop.f32.mrf.mxu0
      %v357 = vadd.f32 0.0, %v356
      %v358 = vpop.f32.mrf.mxu0
      %v359 = vadd.f32 0.0, %v358
      %360 = vdwg.mxu0
      %v361 = vadd.f32 %v307, %v357
      %v362 = vadd.f32 %v309, %v359
      %v363 = vadd.f32 %v361, %v362
      %v364 = vrot.slane %v363, 4
      %v365 = vadd.f32 %v363, %v364
      %v366 = vrot.slane %v365, 2
      %v367 = vadd.f32 %v365, %v366
      %v368 = vrot.slane %v367, 1
      %v369 = vadd.f32 %v367, %v368
      %370 = vst [vmem:[%s184] sm:$0x1] %v369
      %v371 = vmul.f32 %v361, %v361
      %v372 = vmul.f32 %v362, %v362
      %v373 = vadd.f32 %v371, %v372
      %v374 = vrot.slane %v373, 4
      %v375 = vadd.f32 %v373, %v374
      %v376 = vrot.slane %v375, 2
      %v377 = vadd.f32 %v375, %v376
      %v378 = vrot.slane %v377, 1
      %v379 = vadd.f32 %v377, %v378
      %380 = vst [vmem:[%s184 + $0x1] sm:$0x1] %v379
      %v381 = vpack.c.bf16 %v361, %v361
      %v382 = vpack.c.bf16 %v362, %v362
      %383 = vst [vmem:[%s179] sm:$0xf] %v381
      %384 = vst [vmem:[%s179 + $0x4] sm:$0xf] %v382
      %s385 = smul.u32 2, %s15
      %p386 = scmp.lt.s32.totalorder %s385, 3
      %s387 = scalar_select %p386, %s385, 3
      %s388 = smul.addr %s387, 4
      %s389 = scalar_lea.vmem %s2, %s388
      %p390 = scmp.lt.s32.totalorder %s15, 1
      %s391 = scalar_select %p390, %s15, 1
      %s392 = smul.addr %s391, 2
      %s393 = scalar_lea.vmem %s3, %s392
      // Predicated region
      $region29: #{residual_block_nhwc.3} parent=27 // pred_check
        %p394 = pneg %p80
      $region30: #{residual_block_nhwc.3} parent=27 // pred_check_branch
        %396 = sbr.rel (%p394) target = $region32
      $region31: #{residual_block_nhwc.3} parent=27 // pred_region
        %s397 = smul.u32 2, %s15
      $region32: #{residual_block_nhwc.3} parent=27 // pred_fallthru
        _
      // Predicated region
      $region33: #{residual_block_nhwc.3} parent=27 // pred_check
        %p398 = pneg %p106
      $region34: #{residual_block_nhwc.3} parent=27 // pred_check_branch
        %400 = sbr.rel (%p398) target = $region36
      $region35: #{residual_block_nhwc.3} parent=27 // pred_region
        _
      $region36: #{residual_block_nhwc.3} parent=27 // pred_fallthru
        _
    $region28: #{residual_block_nhwc.3} parent=5 // pred_fallthru
      _
    %p401 = scmp.le.s32.totalorder 2, %s10
    // Predicated region
    $region37: #{residual_block_nhwc.3} parent=5 // pred_check
      %p402 = pneg %p401
    $region38: #{residual_block_nhwc.3} parent=5 // pred_check_branch
      %404 = sbr.rel (%p402) target = $region40
    $region39: #{residual_block_nhwc.3} parent=5 // pred_region
      %s405 = ssub.s32 %s10, 2
      // Predicated region
      $region41: #{residual_block_nhwc.3} parent=39 // pred_check
        %p406 = pneg %p86
      $region42: #{residual_block_nhwc.3} parent=39 // pred_check_branch
        %408 = sbr.rel (%p406) target = $region44
      $region43: #{residual_block_nhwc.3} parent=39 // pred_region
        %s409 = smul.u32 2, %s16
        %p410 = scmp.lt.s32.totalorder %s409, 3
        %s411 = scalar_select %p410, %s409, 3
        %s412 = smul.addr %s411, 4
        %s413 = scalar_lea.vmem %s2, %s412
      $region44: #{residual_block_nhwc.3} parent=39 // pred_fallthru
        _
      // Predicated region
      $region45: #{residual_block_nhwc.3} parent=39 // pred_check
        %p414 = pneg %p112
      $region46: #{residual_block_nhwc.3} parent=39 // pred_check_branch
        %416 = sbr.rel (%p414) target = $region48
      $region47: #{residual_block_nhwc.3} parent=39 // pred_region
        %p417 = scmp.lt.s32.totalorder %s16, 1
        %s418 = scalar_select %p417, %s16, 1
        %s419 = smul.addr %s418, 2
        %s420 = scalar_lea.vmem %s3, %s419
      $region48: #{residual_block_nhwc.3} parent=39 // pred_fallthru
        _
    $region40: #{residual_block_nhwc.3} parent=5 // pred_fallthru
      _
  $region6: #{residual_block_nhwc.3} parent=0 // loop_footer
    %s14 = sadd.s32 1, %s10
  $region7: #{residual_block_nhwc.3} parent=0 // loop_footer_branch
    %9 = sbr.rel target = $region3
  $region8: #{residual_block_nhwc.3} parent=0 // loop_exit
    _

// kernel: residual_block_nhwc.5
$region0: #{residual_block_nhwc.5}
  #allocation0 [shape = 'u32[]', space=smem, size = 0x4, offset = 0x4, fixed_abs, tag = 'smem constant byte address 0x4 - core index']
  #allocation1 [shape = 'u32[72,128]{1,0:T(1,128)}', space=vmem, size = 0x9000, scoped, tag = 'internal scratch']
  %s0 = inlined_call_operand.vmem [shape: bf16[32,128], index: 0, kind: input, shape index: {}]
  %s1 = inlined_call_operand.vmem [shape: bf16[32,64], index: 1, kind: input, shape index: {}]
  %s2 = inlined_call_operand.vmem [shape: bf16[64,128], index: 2, kind: input, shape index: {}]
  %s3 = inlined_call_operand.vmem [shape: f32[1,128], index: 3, kind: input, shape index: {}]
  %s4 = inlined_call_operand.vmem [shape: f32[1,128], index: 4, kind: input, shape index: {}]
  %s5 = inlined_call_operand.vmem [shape: f32[32,128], index: 5, kind: output, shape index: {}]
  %s6 = sld [smem:[#allocation0]]
  $region53: #{residual_block_nhwc.5} parent=0
    _
  %s8 = ssub.s32 1, %s6
  %s9 = scalar_select 0, %s8, %s6
  loop: start=0, step=1, limit=4
  $region2: #{residual_block_nhwc.5} parent=0 // loop_pre_header
    _
  $region3: #{residual_block_nhwc.5} parent=0 // loop_header
    %s11 = sphi 0, %s15
    %p12 = scmp.ge.s32.totalorder %s11, 4
    %s21 = sphi 0, %s23
    %s24 = sphi 0, %s21
    %s25 = sphi 0, %s24
    %s41 = sphi 0, %s25
    %s47 = sphi 0, %s49
    %s50 = sphi 0, %s47
    %s51 = sphi 0, %s50
    %s67 = sphi 0, %s51
    %s71 = sphi 0, %s71
    %s73 = sphi 0, %s71
    %s74 = sphi 0, %s73
    %s88 = sphi 0, %s74
    %s92 = sphi 0, %s92
    %s94 = sphi 0, %s92
    %s95 = sphi 0, %s94
    %s109 = sphi 0, %s95
    %s113 = sphi 0, %s113
    %s115 = sphi 0, %s113
    %s116 = sphi 0, %s115
    %s130 = sphi 0, %s116
    %s136 = sphi 0, %s138
    %s139 = sphi 0, %s136
    %s140 = sphi 0, %s139
    %s156 = sphi 0, %s140
  $region4: #{residual_block_nhwc.5} parent=0 // loop_header_branch
    %14 = sbr.rel (%p12) target = $region8
  $region5: #{residual_block_nhwc.5} parent=0 // loop_body
    %s16 = ssub.s32 %s11, 1
    %s17 = ssub.s32 %s11, 2
    %s18 = sadd.s32 %s11, 1
    %s19 = ssub.s32 %s11, %s18
    %p20 = scmp.eq.s32.totalorder %s19, 0
    %s22 = sadd.s32 %s21, 1
    %s23 = scalar_select %p20, %s21, %s22
    %p26 = pneg %p20
    %p27 = scmp.eq.s32.totalorder %s11, 1
    %p28 = por %p26, %p27
    %p29 = scmp.ne.s32.totalorder %s21, %s24
    %p30 = scmp.eq.s32.totalorder %s11, 0
    %p31 = por %p29, %p30
    %p32 = scmp.ne.s32.totalorder %s21, %s24
    %p33 = scmp.eq.s32.totalorder %s16, 1
    %p34 = por %p32, %p33
    %p35 = scmp.ne.s32.totalorder %s24, %s25
    %p36 = scmp.eq.s32.totalorder %s16, 0
    %p37 = por %p35, %p36
    %p38 = scmp.ne.s32.totalorder %s24, %s25
    %p39 = scmp.eq.s32.totalorder %s17, 1
    %p40 = por %p38, %p39
    %p42 = scmp.ne.s32.totalorder %s25, %s41
    %p43 = scmp.eq.s32.totalorder %s17, 0
    %p44 = por %p42, %p43
    %s45 = ssub.s32 %s11, %s18
    %p46 = scmp.eq.s32.totalorder %s45, 0
    %s48 = sadd.s32 %s47, 1
    %s49 = scalar_select %p46, %s47, %s48
    %p52 = pneg %p46
    %p53 = scmp.eq.s32.totalorder %s11, 1
    %p54 = por %p52, %p53
    %p55 = scmp.ne.s32.totalorder %s47, %s50
    %p56 = scmp.eq.s32.totalorder %s11, 0
    %p57 = por %p55, %p56
    %p58 = scmp.ne.s32.totalorder %s47, %s50
    %p59 = scmp.eq.s32.totalorder %s16, 1
    %p60 = por %p58, %p59
    %p61 = scmp.ne.s32.totalorder %s50, %s51
    %p62 = scmp.eq.s32.totalorder %s16, 0
    %p63 = por %p61, %p62
    %p64 = scmp.ne.s32.totalorder %s50, %s51
    %p65 = scmp.eq.s32.totalorder %s17, 1
    %p66 = por %p64, %p65
    %p68 = scmp.ne.s32.totalorder %s51, %s67
    %p69 = scmp.eq.s32.totalorder %s17, 0
    %p70 = por %p68, %p69
    %s72 = sadd.s32 %s71, 1
    %p75 = scmp.eq.s32.totalorder %s11, 1
    %p76 = scmp.ne.s32.totalorder %s71, %s73
    %p77 = scmp.eq.s32.totalorder %s11, 0
    %p78 = por %p76, %p77
    %p79 = scmp.ne.s32.totalorder %s71, %s73
    %p80 = scmp.eq.s32.totalorder %s16, 1
    %p81 = por %p79, %p80
    %p82 = scmp.ne.s32.totalorder %s73, %s74
    %p83 = scmp.eq.s32.totalorder %s16, 0
    %p84 = por %p82, %p83
    %p85 = scmp.ne.s32.totalorder %s73, %s74
    %p86 = scmp.eq.s32.totalorder %s17, 1
    %p87 = por %p85, %p86
    %p89 = scmp.ne.s32.totalorder %s74, %s88
    %p90 = scmp.eq.s32.totalorder %s17, 0
    %p91 = por %p89, %p90
    %s93 = sadd.s32 %s92, 1
    %p96 = scmp.eq.s32.totalorder %s11, 1
    %p97 = scmp.ne.s32.totalorder %s92, %s94
    %p98 = scmp.eq.s32.totalorder %s11, 0
    %p99 = por %p97, %p98
    %p100 = scmp.ne.s32.totalorder %s92, %s94
    %p101 = scmp.eq.s32.totalorder %s16, 1
    %p102 = por %p100, %p101
    %p103 = scmp.ne.s32.totalorder %s94, %s95
    %p104 = scmp.eq.s32.totalorder %s16, 0
    %p105 = por %p103, %p104
    %p106 = scmp.ne.s32.totalorder %s94, %s95
    %p107 = scmp.eq.s32.totalorder %s17, 1
    %p108 = por %p106, %p107
    %p110 = scmp.ne.s32.totalorder %s95, %s109
    %p111 = scmp.eq.s32.totalorder %s17, 0
    %p112 = por %p110, %p111
    %s114 = sadd.s32 %s113, 1
    %p117 = scmp.eq.s32.totalorder %s11, 1
    %p118 = scmp.ne.s32.totalorder %s113, %s115
    %p119 = scmp.eq.s32.totalorder %s11, 0
    %p120 = por %p118, %p119
    %p121 = scmp.ne.s32.totalorder %s113, %s115
    %p122 = scmp.eq.s32.totalorder %s16, 1
    %p123 = por %p121, %p122
    %p124 = scmp.ne.s32.totalorder %s115, %s116
    %p125 = scmp.eq.s32.totalorder %s16, 0
    %p126 = por %p124, %p125
    %p127 = scmp.ne.s32.totalorder %s115, %s116
    %p128 = scmp.eq.s32.totalorder %s17, 1
    %p129 = por %p127, %p128
    %p131 = scmp.ne.s32.totalorder %s116, %s130
    %p132 = scmp.eq.s32.totalorder %s17, 0
    %p133 = por %p131, %p132
    %s134 = ssub.s32 %s11, %s18
    %p135 = scmp.eq.s32.totalorder %s134, 0
    %s137 = sadd.s32 %s136, 1
    %s138 = scalar_select %p135, %s136, %s137
    %p141 = pneg %p135
    %p142 = scmp.eq.s32.totalorder %s11, 1
    %p143 = por %p141, %p142
    %p144 = scmp.ne.s32.totalorder %s136, %s139
    %p145 = scmp.eq.s32.totalorder %s11, 0
    %p146 = por %p144, %p145
    %p147 = scmp.ne.s32.totalorder %s136, %s139
    %p148 = scmp.eq.s32.totalorder %s16, 1
    %p149 = por %p147, %p148
    %p150 = scmp.ne.s32.totalorder %s139, %s140
    %p151 = scmp.eq.s32.totalorder %s16, 0
    %p152 = por %p150, %p151
    %p153 = scmp.ne.s32.totalorder %s139, %s140
    %p154 = scmp.eq.s32.totalorder %s17, 1
    %p155 = por %p153, %p154
    %p157 = scmp.ne.s32.totalorder %s140, %s156
    %p158 = scmp.eq.s32.totalorder %s17, 0
    %p159 = por %p157, %p158
    %p160 = scmp.le.s32.totalorder 1, %s11
    %p161 = scmp.lt.s32.totalorder %s11, 3
    %p162 = pnand %p160, %p161
    %p163 = pneg %p162
    // Predicated region
    $region9: #{residual_block_nhwc.5} parent=5 // pred_check
      _
    $region10: #{residual_block_nhwc.5} parent=5 // pred_check_branch
      %165 = sbr.rel (%p162) target = $region12
    $region11: #{residual_block_nhwc.5} parent=5 // pred_region
      %s166 = ssub.s32 %s11, 1
      // Predicated region
      $region13: #{residual_block_nhwc.5} parent=11 // pred_check
        %p167 = pneg %p84
      $region14: #{residual_block_nhwc.5} parent=11 // pred_check_branch
        %169 = sbr.rel (%p167) target = $region16
      $region15: #{residual_block_nhwc.5} parent=11 // pred_region
        _
      $region16: #{residual_block_nhwc.5} parent=11 // pred_fallthru
        _
      // Predicated region
      $region17: #{residual_block_nhwc.5} parent=11 // pred_check
        %p170 = pneg %p105
      $region18: #{residual_block_nhwc.5} parent=11 // pred_check_branch
        %172 = sbr.rel (%p170) target = $region20
      $region19: #{residual_block_nhwc.5} parent=11 // pred_region
        _
      $region20: #{residual_block_nhwc.5} parent=11 // pred_fallthru
        _
      // Predicated region
      $region21: #{residual_block_nhwc.5} parent=11 // pred_check
        %p173 = pneg %p126
      $region22: #{residual_block_nhwc.5} parent=11 // pred_check_branch
        %175 = sbr.rel (%p173) target = $region24
      $region23: #{residual_block_nhwc.5} parent=11 // pred_region
        _
      $region24: #{residual_block_nhwc.5} parent=11 // pred_fallthru
        _
    $region12: #{residual_block_nhwc.5} parent=5 // pred_fallthru
      _
    %p176 = scmp.lt.s32.totalorder %s11, 2
    // Predicated region
    $region25: #{residual_block_nhwc.5} parent=5 // pred_check
      %p177 = pneg %p176
    $region26: #{residual_block_nhwc.5} parent=5 // pred_check_branch
      %179 = sbr.rel (%p177) target = $region28
    $region27: #{residual_block_nhwc.5} parent=5 // pred_region
      // Predicated region
      $region29: #{residual_block_nhwc.5} parent=27 // pred_check
        %p180 = pneg %p31
      $region30: #{residual_block_nhwc.5} parent=27 // pred_check_branch
        %182 = sbr.rel (%p180) target = $region32
      $region31: #{residual_block_nhwc.5} parent=27 // pred_region
        %s183 = smul.u32 2, %s11
        %p184 = scmp.lt.s32.totalorder %s183, 3
        %s185 = scalar_select %p184, %s183, 3
        %s186 = smul.addr %s185, 4
        %s187 = scalar_lea.vmem %s0, %s186
        %s188 = smul.u32 2, %s11
      $region32: #{residual_block_nhwc.5} parent=27 // pred_fallthru
        _
      // Predicated region
      $region33: #{residual_block_nhwc.5} parent=27 // pred_check
        %p189 = pneg %p57
      $region34: #{residual_block_nhwc.5} parent=27 // pred_check_branch
        %191 = sbr.rel (%p189) target = $region36
      $region35: #{residual_block_nhwc.5} parent=27 // pred_region
        %s192 = smul.u32 2, %s11
        %p193 = scmp.lt.s32.totalorder %s192, 3
        %s194 = scalar_select %p193, %s192, 3
        %s195 = smul.addr %s194, 4
        %s196 = scalar_lea.vmem %s1, %s195
        %s197 = smul.u32 2, %s11
      $region36: #{residual_block_nhwc.5} parent=27 // pred_fallthru
        _
    $region28: #{residual_block_nhwc.5} parent=5 // pred_fallthru
      _
    %p198 = scmp.le.s32.totalorder 1, %s11
    %p199 = scmp.lt.s32.totalorder %s11, 3
    %p200 = pnand %p198, %p199
    %p201 = pneg %p200
    // Predicated region
    $region37: #{residual_block_nhwc.5} parent=5 // pred_check
      _
    $region38: #{residual_block_nhwc.5} parent=5 // pred_check_branch
      %203 = sbr.rel (%p200) target = $region40
    $region39: #{residual_block_nhwc.5} parent=5 // pred_region
      %s204 = ssub.s32 %s11, 1
      %s205 = smul.u32 2, %s16
      %p206 = scmp.lt.s32.totalorder %s205, 3
      %s207 = scalar_select %p206, %s205, 3
      %s208 = smul.addr %s207, 4
      %s209 = scalar_lea.vmem %s0, %s208
      %p210 = pneg %p37
      %p211 = pneg %p34
      %s212 = smul.u32 2, %s16
      %p213 = scmp.lt.s32.totalorder %s212, 3
      %s214 = scalar_select %p213, %s212, 3
      %s215 = smul.addr %s214, 4
      %s216 = scalar_lea.vmem %s1, %s215
      %p217 = pneg %p63
      %p218 = pneg %p60
      %p219 = pneg %p84
      %p220 = pneg %p81
      %p221 = pneg %p105
      %p222 = pneg %p102
      %p223 = pneg %p126
      %p224 = pneg %p123
      %p225 = pneg %p152
      %p226 = pneg %p149
      %s227 = smul.u32 2, %s16
      %p228 = scmp.lt.s32.totalorder %s227, 3
      %s229 = scalar_select %p228, %s227, 3
      %s230 = smul.addr %s229, 8
      %s231 = scalar_lea.vmem %s5, %s230
      %s232 = smul.u32 2, %s16
      %p233 = scmp.lt.s32.totalorder %s232, 3
      %s234 = scalar_select %p233, %s232, 3
      %s235 = smul.addr %s234, 4
      %s236 = scalar_lea.vmem %s0, %s235
      %s237 = smul.u32 2, %s16
      %s238 = smul.u32 2, %s16
      %p239 = scmp.lt.s32.totalorder %s238, 3
      %s240 = scalar_select %p239, %s238, 3
      %s241 = smul.addr %s240, 4
      %s242 = scalar_lea.vmem %s1, %s241
      %s243 = smul.u32 2, %s16
      %s244 = smul.u32 2, %s16
      %p245 = scmp.lt.s32.totalorder %s244, 3
      %s246 = scalar_select %p245, %s244, 3
      %s247 = smul.addr %s246, 8
      %s248 = scalar_lea.vmem %s5, %s247
      %s249 = smul.u32 2, %s16
      %v251 = vld [vmem:[%s242] sm:$0xf]
      %v252 = vld [vmem:[%s242 + $0x4] sm:$0xf]
      %v253 = vld [vmem:[%s2] sm:$0xf]
      %v254 = vld [vmem:[%s2 + $0x4] sm:$0xf]
      %v255 = vld [vmem:[%s2 + $0x8] sm:$0xf]
      %v256 = vld [vmem:[%s2 + $0xc] sm:$0xf]
      %v257 = vld [vmem:[%s2 + $0x10] sm:$0xf]
      %v258 = vld [vmem:[%s2 + $0x14] sm:$0xf]
      %v259 = vld [vmem:[%s2 + $0x18] sm:$0xf]
      %v260 = vld [vmem:[%s2 + $0x1c] sm:$0xf]
      %v263 = vunpack.c.l.b16 %v251
      %v264 = vunpack.c.l.b16 %v252
      %v265 = vpack.c.b16 %v264, %v263
      %v274 = vunpack.c.l.b16 %v253
      %v275 = vunpack.c.l.b16 %v254
      %v276 = vunpack.c.l.b16 %v255
      %v277 = vunpack.c.l.b16 %v256
      %v278 = vunpack.c.l.b16 %v257
      %v279 = vunpack.c.l.b16 %v258
      %v280 = vunpack.c.l.b16 %v259
      %v281 = vunpack.c.l.b16 %v260
      %v282 = vpack.c.b16 %v275, %v274
      %v283 = vpack.c.b16 %v277, %v276
      %v284 = vpack.c.b16 %v279, %v278
      %v285 = vpack.c.b16 %v281, %v280
      %vm290 = vcmask 523264
      %v292 = vsel %vm290, %v265, 0
      %294 = vmatpush.bf16.msra.mxu0 0
      %295 = vmatpush.bf16.msra.mxu0 0
      %296 = vmatpush.bf16.msra.mxu0 0
      %297 = vmatpush.bf16.msra.mxu0 0
      %298 = vmatpush.bf16.msra.mxu0 %v285
      %299 = vmatpush.bf16.msra.mxu0 %v284
      %300 = vmatpush.bf16.msra.mxu0 %v283
      %301 = vmatpush.bf16.msra.mxu0 %v282
      %302 = vmatmul.bf16.gmra.mxu0 %v292
      %v303 = vpop.f32.mrf.mxu0
      %v304 = vadd.f32 0.0, %v303
      %v305 = vpop.f32.mrf.mxu0
      %v306 = vadd.f32 0.0, %v305
      %307 = vdwg.mxu0
      %v308 = vld [vmem:[%s236] sm:$0xf]
      %v309 = vld [vmem:[%s236 + $0x4] sm:$0xf]
      %v310 = vunpack.c.l.bf16 %v308
      %v311 = vunpack.c.l.bf16 %v309
      %v312 = vld [vmem:[%s3] sm:$0x1]
      %v314 = vperm.slane %v312, 0
      %v316 = vmul.f32 %v310, %v314
      %v317 = vmul.f32 %v311, %v314
      %v318 = vld [vmem:[%s4] sm:$0x1]
      %v320 = vperm.slane %v318, 0
      %v322 = vadd.f32 %v316, %v320
      %v323 = vadd.f32 %v317, %v320
      %v324 = vadd.f32 %v322, %v304
      %v325 = vadd.f32 %v323, %v306
      %v326 = vmul.f32 %v324, 0.5
      %v327 = vmul.f32 %v325, 0.5
      %v328 = vmul.f32 %v324, 0.70710677
      %v329 = vmul.f32 %v325, 0.70710677
      %v330 = vmul.f32 %v328, %v328
      %v331 = vmin.f32 16.0, %v330
      %v332 = vmul.f32 %v331, 2.1237322e-06
      %v333 = vadd.f32 %v332, 0.00028619796
      %v334 = vmul.f32 %v331, %v333
      %v335 = vadd.f32 %v334, 0.0036580483
      %v336 = vmul.f32 %v331, %v335
      %v337 = vadd.f32 %v336, 0.05243302
      %v338 = vmul.f32 %v331, %v337
      %v339 = vadd.f32 %v338, 0.18741608
      %v340 = vmul.f32 %v331, %v339
      %v341 = vadd.f32 %v340, 1.1283791
      %v342 = vmul.f32 %v328, %v341
      %v343 = vmul.f32 %v331, 3.8918573e-05
      %v344 = vadd.f32 %v343, 0.001143296
      %v345 = vmul.f32 %v331, %v344
      %v346 = vadd.f32 %v345, 0.014752088
      %v347 = vmul.f32 %v331, %v346
      %v348 = vadd.f32 %v347, 0.112945676
      %v349 = vmul.f32 %v331, %v348
      %v350 = vadd.f32 %v349, 0.4994258
      %v351 = vmul.f32 %v331, %v350
      %v352 = vadd.f32 %v351, 1.0
      %v353 = vrcp.pop %v352
      %v354 = vmul.f32 %v352, %v353
      %v355 = vsub.f32 1.0, %v354
      %v356 = vmul.f32 %v353, %v355
      %v357 = vadd.f32 %v353, %v356
      %vm358 = vweird.f32 %v352
      %vm359 = vweird.f32 %v353
      %vm360 = vmor %vm358, %vm359
      %v361 = vsel %vm360, %v353, %v357
      %v362 = vand.u32 2147483647, %v352
      %vm363 = vcmp.eq.f32.partialorder %v362, 8.507059e+37
      %v364 = vand.u32 %v352, 2147483648
      %v365 = vor.u32 1.1754944e-38, %v364
      %v366 = vsel %vm363, %v365, %v361
      %v367 = vmul.f32 %v342, %v366
      %v368 = vmin.f32 %v367, 1.0
      %v369 = vmax.f32 %v368, -1.0
      %v370 = vmul.f32 %v329, %v329
      %v371 = vmin.f32 16.0, %v370
      %v372 = vmul.f32 %v371, 2.1237322e-06
      %v373 = vadd.f32 %v372, 0.00028619796
      %v374 = vmul.f32 %v371, %v373
      %v375 = vadd.f32 %v374, 0.0036580483
      %v376 = vmul.f32 %v371, %v375
      %v377 = vadd.f32 %v376, 0.05243302
      %v378 = vmul.f32 %v371, %v377
      %v379 = vadd.f32 %v378, 0.18741608
      %v380 = vmul.f32 %v371, %v379
      %v381 = vadd.f32 %v380, 1.1283791
      %v382 = vmul.f32 %v329, %v381
      %v383 = vmul.f32 %v371, 3.8918573e-05
      %v384 = vadd.f32 %v383, 0.001143296
      %v385 = vmul.f32 %v371, %v384
      %v386 = vadd.f32 %v385, 0.014752088
      %v387 = vmul.f32 %v371, %v386
      %v388 = vadd.f32 %v387, 0.112945676
      %v389 = vmul.f32 %v371, %v388
      %v390 = vadd.f32 %v389, 0.4994258
      %v391 = vmul.f32 %v371, %v390
      %v392 = vadd.f32 %v391, 1.0
      %v393 = vrcp.pop %v392
      %v394 = vmul.f32 %v392, %v393
      %v395 = vsub.f32 1.0, %v394
      %v396 = vmul.f32 %v393, %v395
      %v397 = vadd.f32 %v393, %v396
      %vm398 = vweird.f32 %v392
      %vm399 = vweird.f32 %v393
      %vm400 = vmor %vm398, %vm399
      %v401 = vsel %vm400, %v393, %v397
      %v402 = vand.u32 2147483647, %v392
      %vm403 = vcmp.eq.f32.partialorder %v402, 8.507059e+37
      %v404 = vand.u32 %v392, 2147483648
      %v405 = vor.u32 1.1754944e-38, %v404
      %v406 = vsel %vm403, %v405, %v401
      %v407 = vmul.f32 %v382, %v406
      %v408 = vmin.f32 %v407, 1.0
      %v409 = vmax.f32 %v408, -1.0
      %v410 = vadd.f32 %v369, 1.0
      %v411 = vadd.f32 %v409, 1.0
      %v412 = vmul.f32 %v326, %v410
      %v413 = vmul.f32 %v327, %v411
      %414 = vst [vmem:[%s248] sm:$0xff] %v412
      %415 = vst [vmem:[%s248 + $0x8] sm:$0xff] %v413
      %s416 = smul.u32 2, %s16
      %p417 = scmp.lt.s32.totalorder %s416, 3
      %s418 = scalar_select %p417, %s416, 3
      %s419 = smul.addr %s418, 8
      %s420 = scalar_lea.vmem %s5, %s419
      // Predicated region
      $region41: #{residual_block_nhwc.5} parent=39 // pred_check
        %p421 = pneg %p149
      $region42: #{residual_block_nhwc.5} parent=39 // pred_check_branch
        %423 = sbr.rel (%p421) target = $region44
      $region43: #{residual_block_nhwc.5} parent=39 // pred_region
        %s424 = smul.u32 2, %s16
      $region44: #{residual_block_nhwc.5} parent=39 // pred_fallthru
        _
    $region40: #{residual_block_nhwc.5} parent=5 // pred_fallthru
      _
    %p425 = scmp.le.s32.totalorder 2, %s11
    // Predicated region
    $region45: #{residual_block_nhwc.5} parent=5 // pred_check
      %p426 = pneg %p425
    $region46: #{residual_block_nhwc.5} parent=5 // pred_check_branch
      %428 = sbr.rel (%p426) target = $region48
    $region47: #{residual_block_nhwc.5} parent=5 // pred_region
      %s429 = ssub.s32 %s11, 2
      // Predicated region
      $region49: #{residual_block_nhwc.5} parent=47 // pred_check
        %p430 = pneg %p155
      $region50: #{residual_block_nhwc.5} parent=47 // pred_check_branch
        %432 = sbr.rel (%p430) target = $region52
      $region51: #{residual_block_nhwc.5} parent=47 // pred_region
        %s433 = smul.u32 2, %s17
        %p434 = scmp.lt.s32.totalorder %s433, 3
        %s435 = scalar_select %p434, %s433, 3
        %s436 = smul.addr %s435, 8
        %s437 = scalar_lea.vmem %s5, %s436
      $region52: #{residual_block_nhwc.5} parent=47 // pred_fallthru
        _
    $region48: #{residual_block_nhwc.5} parent=5 // pred_fallthru
      _
  $region6: #{residual_block_nhwc.5} parent=0 // loop_footer
    %s15 = sadd.s32 1, %s11
  $region7: #{residual_block_nhwc.5} parent=0 // loop_footer_branch
    %10 = sbr.rel target = $region3
  $region8: #{residual_block_nhwc.5} parent=0 // loop_exit
    _

// kernel: residual_block_nhwc.4
$region0: #{residual_block_nhwc.4}
  #allocation0 [shape = 'u32[]', space=smem, size = 0x4, offset = 0x4, fixed_abs, tag = 'smem constant byte address 0x4 - core index']
  #allocation1 [shape = 'u32[72,128]{1,0:T(1,128)}', space=vmem, size = 0x9000, scoped, tag = 'internal scratch']
  %s0 = inlined_call_operand.vmem [shape: bf16[32,128], index: 0, kind: input, shape index: {}]
  %s1 = inlined_call_operand.vmem [shape: f32[1,128], index: 1, kind: input, shape index: {}]
  %s2 = inlined_call_operand.vmem [shape: f32[1,128], index: 2, kind: input, shape index: {}]
  %s3 = inlined_call_operand.vmem [shape: bf16[3,128,128], index: 3, kind: input, shape index: {}]
  %s4 = inlined_call_operand.vmem [shape: bf16[32,128], index: 4, kind: output, shape index: {0}]
  %s5 = inlined_call_operand.vmem [shape: f32[2,2,128], index: 5, kind: output, shape index: {1}]
  %6 = xla_tuple %s4, %s5
  %s7 = sld [smem:[#allocation0]]
  $region57: #{residual_block_nhwc.4} parent=0
    _
  %s9 = ssub.s32 1, %s7
  %s10 = scalar_select 0, %s9, %s7
  loop: start=0, step=1, limit=4
  $region2: #{residual_block_nhwc.4} parent=0 // loop_pre_header
    _
  $region3: #{residual_block_nhwc.4} parent=0 // loop_header
    %s12 = sphi 0, %s16
    %p13 = scmp.ge.s32.totalorder %s12, 4
    %s22 = sphi 0, %s24
    %s25 = sphi 0, %s22
    %s26 = sphi 0, %s25
    %s42 = sphi 0, %s26
    %s46 = sphi 0, %s46
    %s48 = sphi 0, %s46
    %s49 = sphi 0, %s48
    %s63 = sphi 0, %s49
    %s67 = sphi 0, %s67
    %s69 = sphi 0, %s67
    %s70 = sphi 0, %s69
    %s84 = sphi 0, %s70
    %s88 = sphi 0, %s88
    %s90 = sphi 0, %s88
    %s91 = sphi 0, %s90
    %s105 = sphi 0, %s91
    %s111 = sphi 0, %s113
    %s114 = sphi 0, %s111
    %s115 = sphi 0, %s114
    %s131 = sphi 0, %s115
    %s137 = sphi 0, %s139
    %s140 = sphi 0, %s137
    %s141 = sphi 0, %s140
    %s157 = sphi 0, %s141
  $region4: #{residual_block_nhwc.4} parent=0 // loop_header_branch
    %15 = sbr.rel (%p13) target = $region8
  $region5: #{residual_block_nhwc.4} parent=0 // loop_body
    %s17 = ssub.s32 %s12, 1
    %s18 = ssub.s32 %s12, 2
    %s19 = sadd.s32 %s12, 1
    %s20 = ssub.s32 %s12, %s19
    %p21 = scmp.eq.s32.totalorder %s20, 0
    %s23 = sadd.s32 %s22, 1
    %s24 = scalar_select %p21, %s22, %s23
    %p27 = pneg %p21
    %p28 = scmp.eq.s32.totalorder %s12, 1
    %p29 = por %p27, %p28
    %p30 = scmp.ne.s32.totalorder %s22, %s25
    %p31 = scmp.eq.s32.totalorder %s12, 0
    %p32 = por %p30, %p31
    %p33 = scmp.ne.s32.totalorder %s22, %s25
    %p34 = scmp.eq.s32.totalorder %s17, 1
    %p35 = por %p33, %p34
    %p36 = scmp.ne.s32.totalorder %s25, %s26
    %p37 = scmp.eq.s32.totalorder %s17, 0
    %p38 = por %p36, %p37
    %p39 = scmp.ne.s32.totalorder %s25, %s26
    %p40 = scmp.eq.s32.totalorder %s18, 1
    %p41 = por %p39, %p40
    %p43 = scmp.ne.s32.totalorder %s26, %s42
    %p44 = scmp.eq.s32.totalorder %s18, 0
    %p45 = por %p43, %p44
    %s47 = sadd.s32 %s46, 1
    %p50 = scmp.eq.s32.totalorder %s12, 1
    %p51 = scmp.ne.s32.totalorder %s46, %s48
    %p52 = scmp.eq.s32.totalorder %s12, 0
    %p53 = por %p51, %p52
    %p54 = scmp.ne.s32.totalorder %s46, %s48
    %p55 = scmp.eq.s32.totalorder %s17, 1
    %p56 = por %p54, %p55
    %p57 = scmp.ne.s32.totalorder %s48, %s49
    %p58 = scmp.eq.s32.totalorder %s17, 0
    %p59 = por %p57, %p58
    %p60 = scmp.ne.s32.totalorder %s48, %s49
    %p61 = scmp.eq.s32.totalorder %s18, 1
    %p62 = por %p60, %p61
    %p64 = scmp.ne.s32.totalorder %s49, %s63
    %p65 = scmp.eq.s32.totalorder %s18, 0
    %p66 = por %p64, %p65
    %s68 = sadd.s32 %s67, 1
    %p71 = scmp.eq.s32.totalorder %s12, 1
    %p72 = scmp.ne.s32.totalorder %s67, %s69
    %p73 = scmp.eq.s32.totalorder %s12, 0
    %p74 = por %p72, %p73
    %p75 = scmp.ne.s32.totalorder %s67, %s69
    %p76 = scmp.eq.s32.totalorder %s17, 1
    %p77 = por %p75, %p76
    %p78 = scmp.ne.s32.totalorder %s69, %s70
    %p79 = scmp.eq.s32.totalorder %s17, 0
    %p80 = por %p78, %p79
    %p81 = scmp.ne.s32.totalorder %s69, %s70
    %p82 = scmp.eq.s32.totalorder %s18, 1
    %p83 = por %p81, %p82
    %p85 = scmp.ne.s32.totalorder %s70, %s84
    %p86 = scmp.eq.s32.totalorder %s18, 0
    %p87 = por %p85, %p86
    %s89 = sadd.s32 %s88, 1
    %p92 = scmp.eq.s32.totalorder %s12, 1
    %p93 = scmp.ne.s32.totalorder %s88, %s90
    %p94 = scmp.eq.s32.totalorder %s12, 0
    %p95 = por %p93, %p94
    %p96 = scmp.ne.s32.totalorder %s88, %s90
    %p97 = scmp.eq.s32.totalorder %s17, 1
    %p98 = por %p96, %p97
    %p99 = scmp.ne.s32.totalorder %s90, %s91
    %p100 = scmp.eq.s32.totalorder %s17, 0
    %p101 = por %p99, %p100
    %p102 = scmp.ne.s32.totalorder %s90, %s91
    %p103 = scmp.eq.s32.totalorder %s18, 1
    %p104 = por %p102, %p103
    %p106 = scmp.ne.s32.totalorder %s91, %s105
    %p107 = scmp.eq.s32.totalorder %s18, 0
    %p108 = por %p106, %p107
    %s109 = ssub.s32 %s12, %s19
    %p110 = scmp.eq.s32.totalorder %s109, 0
    %s112 = sadd.s32 %s111, 1
    %s113 = scalar_select %p110, %s111, %s112
    %p116 = pneg %p110
    %p117 = scmp.eq.s32.totalorder %s12, 1
    %p118 = por %p116, %p117
    %p119 = scmp.ne.s32.totalorder %s111, %s114
    %p120 = scmp.eq.s32.totalorder %s12, 0
    %p121 = por %p119, %p120
    %p122 = scmp.ne.s32.totalorder %s111, %s114
    %p123 = scmp.eq.s32.totalorder %s17, 1
    %p124 = por %p122, %p123
    %p125 = scmp.ne.s32.totalorder %s114, %s115
    %p126 = scmp.eq.s32.totalorder %s17, 0
    %p127 = por %p125, %p126
    %p128 = scmp.ne.s32.totalorder %s114, %s115
    %p129 = scmp.eq.s32.totalorder %s18, 1
    %p130 = por %p128, %p129
    %p132 = scmp.ne.s32.totalorder %s115, %s131
    %p133 = scmp.eq.s32.totalorder %s18, 0
    %p134 = por %p132, %p133
    %s135 = ssub.s32 %s12, %s19
    %p136 = scmp.eq.s32.totalorder %s135, 0
    %s138 = sadd.s32 %s137, 1
    %s139 = scalar_select %p136, %s137, %s138
    %p142 = pneg %p136
    %p143 = scmp.eq.s32.totalorder %s12, 1
    %p144 = por %p142, %p143
    %p145 = scmp.ne.s32.totalorder %s137, %s140
    %p146 = scmp.eq.s32.totalorder %s12, 0
    %p147 = por %p145, %p146
    %p148 = scmp.ne.s32.totalorder %s137, %s140
    %p149 = scmp.eq.s32.totalorder %s17, 1
    %p150 = por %p148, %p149
    %p151 = scmp.ne.s32.totalorder %s140, %s141
    %p152 = scmp.eq.s32.totalorder %s17, 0
    %p153 = por %p151, %p152
    %p154 = scmp.ne.s32.totalorder %s140, %s141
    %p155 = scmp.eq.s32.totalorder %s18, 1
    %p156 = por %p154, %p155
    %p158 = scmp.ne.s32.totalorder %s141, %s157
    %p159 = scmp.eq.s32.totalorder %s18, 0
    %p160 = por %p158, %p159
    %p161 = scmp.le.s32.totalorder 1, %s12
    %p162 = scmp.lt.s32.totalorder %s12, 3
    %p163 = pnand %p161, %p162
    %p164 = pneg %p163
    // Predicated region
    $region9: #{residual_block_nhwc.4} parent=5 // pred_check
      _
    $region10: #{residual_block_nhwc.4} parent=5 // pred_check_branch
      %166 = sbr.rel (%p163) target = $region12
    $region11: #{residual_block_nhwc.4} parent=5 // pred_region
      %s167 = ssub.s32 %s12, 1
      // Predicated region
      $region13: #{residual_block_nhwc.4} parent=11 // pred_check
        %p168 = pneg %p59
      $region14: #{residual_block_nhwc.4} parent=11 // pred_check_branch
        %170 = sbr.rel (%p168) target = $region16
      $region15: #{residual_block_nhwc.4} parent=11 // pred_region
        _
      $region16: #{residual_block_nhwc.4} parent=11 // pred_fallthru
        _
      // Predicated region
      $region17: #{residual_block_nhwc.4} parent=11 // pred_check
        %p171 = pneg %p80
      $region18: #{residual_block_nhwc.4} parent=11 // pred_check_branch
        %173 = sbr.rel (%p171) target = $region20
      $region19: #{residual_block_nhwc.4} parent=11 // pred_region
        _
      $region20: #{residual_block_nhwc.4} parent=11 // pred_fallthru
        _
      // Predicated region
      $region21: #{residual_block_nhwc.4} parent=11 // pred_check
        %p174 = pneg %p101
      $region22: #{residual_block_nhwc.4} parent=11 // pred_check_branch
        %176 = sbr.rel (%p174) target = $region24
      $region23: #{residual_block_nhwc.4} parent=11 // pred_region
        _
      $region24: #{residual_block_nhwc.4} parent=11 // pred_fallthru
        _
    $region12: #{residual_block_nhwc.4} parent=5 // pred_fallthru
      _
    %p177 = scmp.lt.s32.totalorder %s12, 2
    // Predicated region
    $region25: #{residual_block_nhwc.4} parent=5 // pred_check
      %p178 = pneg %p177
    $region26: #{residual_block_nhwc.4} parent=5 // pred_check_branch
      %180 = sbr.rel (%p178) target = $region28
    $region27: #{residual_block_nhwc.4} parent=5 // pred_region
      // Predicated region
      $region29: #{residual_block_nhwc.4} parent=27 // pred_check
        %p181 = pneg %p32
      $region30: #{residual_block_nhwc.4} parent=27 // pred_check_branch
        %183 = sbr.rel (%p181) target = $region32
      $region31: #{residual_block_nhwc.4} parent=27 // pred_region
        %s184 = smul.u32 2, %s12
        %p185 = scmp.lt.s32.totalorder %s184, 3
        %s186 = scalar_select %p185, %s184, 3
        %s187 = smul.addr %s186, 4
        %s188 = scalar_lea.vmem %s0, %s187
        %s189 = smul.u32 2, %s12
      $region32: #{residual_block_nhwc.4} parent=27 // pred_fallthru
        _
    $region28: #{residual_block_nhwc.4} parent=5 // pred_fallthru
      _
    %p190 = scmp.le.s32.totalorder 1, %s12
    %p191 = scmp.lt.s32.totalorder %s12, 3
    %p192 = pnand %p190, %p191
    %p193 = pneg %p192
    // Predicated region
    $region33: #{residual_block_nhwc.4} parent=5 // pred_check
      _
    $region34: #{residual_block_nhwc.4} parent=5 // pred_check_branch
      %195 = sbr.rel (%p192) target = $region36
    $region35: #{residual_block_nhwc.4} parent=5 // pred_region
      %s196 = ssub.s32 %s12, 1
      %s197 = smul.u32 2, %s17
      %p198 = scmp.lt.s32.totalorder %s197, 3
      %s199 = scalar_select %p198, %s197, 3
      %s200 = smul.addr %s199, 4
      %s201 = scalar_lea.vmem %s0, %s200
      %p202 = pneg %p38
      %p203 = pneg %p35
      %p204 = pneg %p59
      %p205 = pneg %p56
      %p206 = pneg %p80
      %p207 = pneg %p77
      %p208 = pneg %p101
      %p209 = pneg %p98
      %p210 = pneg %p127
      %p211 = pneg %p124
      %s212 = smul.u32 2, %s17
      %p213 = scmp.lt.s32.totalorder %s212, 3
      %s214 = scalar_select %p213, %s212, 3
      %s215 = smul.addr %s214, 4
      %s216 = scalar_lea.vmem %s4, %s215
      %p217 = pneg %p153
      %p218 = pneg %p150
      %p219 = scmp.lt.s32.totalorder %s17, 1
      %s220 = scalar_select %p219, %s17, 1
      %s221 = smul.addr %s220, 2
      %s222 = scalar_lea.vmem %s5, %s221
      %s223 = smul.u32 2, %s17
      %p224 = scmp.lt.s32.totalorder %s223, 3
      %s225 = scalar_select %p224, %s223, 3
      %s226 = smul.addr %s225, 4
      %s227 = scalar_lea.vmem %s0, %s226
      %s228 = smul.u32 2, %s17
      %s229 = smul.u32 2, %s17
      %p230 = scmp.lt.s32.totalorder %s229, 3
      %s231 = scalar_select %p230, %s229, 3
      %s232 = smul.addr %s231, 4
      %s233 = scalar_lea.vmem %s4, %s232
      %s234 = smul.u32 2, %s17
      %p235 = scmp.lt.s32.totalorder %s17, 1
      %s236 = scalar_select %p235, %s17, 1
      %s237 = smul.addr %s236, 2
      %s238 = scalar_lea.vmem %s5, %s237
      %v240 = vld [vmem:[%s227] sm:$0xf]
      %v241 = vld [vmem:[%s227 + $0x4] sm:$0xf]
      %v242 = vunpack.c.l.bf16 %v240
      %v243 = vunpack.c.l.bf16 %v241
      %v244 = vld [vmem:[%s1] sm:$0x1]
      %v246 = vperm.slane %v244, 0
      %v248 = vmul.f32 %v242, %v246
      %v249 = vmul.f32 %v243, %v246
      %v250 = vld [vmem:[%s2] sm:$0x1]
      %v252 = vperm.slane %v250, 0
      %v254 = vadd.f32 %v248, %v252
      %v255 = vadd.f32 %v249, %v252
      %v256 = vmul.f32 %v254, 0.5
      %v257 = vmul.f32 %v255, 0.5
      %v258 = vmul.f32 %v254, 0.70710677
      %v259 = vmul.f32 %v255, 0.70710677
      %v260 = vmul.f32 %v258, %v258
      %v261 = vmin.f32 16.0, %v260
      %v262 = vmul.f32 %v261, 2.1237322e-06
      %v263 = vadd.f32 %v262, 0.00028619796
      %v264 = vmul.f32 %v261, %v263
      %v265 = vadd.f32 %v264, 0.0036580483
      %v266 = vmul.f32 %v261, %v265
      %v267 = vadd.f32 %v266, 0.05243302
      %v268 = vmul.f32 %v261, %v267
      %v269 = vadd.f32 %v268, 0.18741608
      %v270 = vmul.f32 %v261, %v269
      %v271 = vadd.f32 %v270, 1.1283791
      %v272 = vmul.f32 %v258, %v271
      %v273 = vmul.f32 %v261, 3.8918573e-05
      %v274 = vadd.f32 %v273, 0.001143296
      %v275 = vmul.f32 %v261, %v274
      %v276 = vadd.f32 %v275, 0.014752088
      %v277 = vmul.f32 %v261, %v276
      %v278 = vadd.f32 %v277, 0.112945676
      %v279 = vmul.f32 %v261, %v278
      %v280 = vadd.f32 %v279, 0.4994258
      %v281 = vmul.f32 %v261, %v280
      %v282 = vadd.f32 %v281, 1.0
      %v283 = vrcp.pop %v282
      %v284 = vmul.f32 %v282, %v283
      %v285 = vsub.f32 1.0, %v284
      %v286 = vmul.f32 %v283, %v285
      %v287 = vadd.f32 %v283, %v286
      %vm288 = vweird.f32 %v282
      %vm289 = vweird.f32 %v283
      %vm290 = vmor %vm288, %vm289
      %v291 = vsel %vm290, %v283, %v287
      %v292 = vand.u32 2147483647, %v282
      %vm293 = vcmp.eq.f32.partialorder %v292, 8.507059e+37
      %v294 = vand.u32 %v282, 2147483648
      %v295 = vor.u32 1.1754944e-38, %v294
      %v296 = vsel %vm293, %v295, %v291
      %v297 = vmul.f32 %v272, %v296
      %v298 = vmin.f32 %v297, 1.0
      %v299 = vmax.f32 %v298, -1.0
      %v300 = vmul.f32 %v259, %v259
      %v301 = vmin.f32 16.0, %v300
      %v302 = vmul.f32 %v301, 2.1237322e-06
      %v303 = vadd.f32 %v302, 0.00028619796
      %v304 = vmul.f32 %v301, %v303
      %v305 = vadd.f32 %v304, 0.0036580483
      %v306 = vmul.f32 %v301, %v305
      %v307 = vadd.f32 %v306, 0.05243302
      %v308 = vmul.f32 %v301, %v307
      %v309 = vadd.f32 %v308, 0.18741608
      %v310 = vmul.f32 %v301, %v309
      %v311 = vadd.f32 %v310, 1.1283791
      %v312 = vmul.f32 %v259, %v311
      %v313 = vmul.f32 %v301, 3.8918573e-05
      %v314 = vadd.f32 %v313, 0.001143296
      %v315 = vmul.f32 %v301, %v314
      %v316 = vadd.f32 %v315, 0.014752088
      %v317 = vmul.f32 %v301, %v316
      %v318 = vadd.f32 %v317, 0.112945676
      %v319 = vmul.f32 %v301, %v318
      %v320 = vadd.f32 %v319, 0.4994258
      %v321 = vmul.f32 %v301, %v320
      %v322 = vadd.f32 %v321, 1.0
      %v323 = vrcp.pop %v322
      %v324 = vmul.f32 %v322, %v323
      %v325 = vsub.f32 1.0, %v324
      %v326 = vmul.f32 %v323, %v325
      %v327 = vadd.f32 %v323, %v326
      %vm328 = vweird.f32 %v322
      %vm329 = vweird.f32 %v323
      %vm330 = vmor %vm328, %vm329
      %v331 = vsel %vm330, %v323, %v327
      %v332 = vand.u32 2147483647, %v322
      %vm333 = vcmp.eq.f32.partialorder %v332, 8.507059e+37
      %v334 = vand.u32 %v322, 2147483648
      %v335 = vor.u32 1.1754944e-38, %v334
      %v336 = vsel %vm333, %v335, %v331
      %v337 = vmul.f32 %v312, %v336
      %v338 = vmin.f32 %v337, 1.0
      %v339 = vmax.f32 %v338, -1.0
      %v340 = vadd.f32 %v299, 1.0
      %v341 = vadd.f32 %v339, 1.0
      %v342 = vmul.f32 %v256, %v340
      %v343 = vmul.f32 %v257, %v341
      %v344 = vpack.c.bf16 %v342, %v342
      %v345 = vpack.c.bf16 %v343, %v343
      %v348 = vunpack.c.l.b16 %v344
      %v349 = vunpack.c.l.b16 %v345
      %v350 = vpack.c.b16 %v349, %v348
      %v352 = vshrl.u32 %v350, 16
      %v354 = vrot.slane %v352, 7
      %v355 = vshll.u32 %v350, 16
      %v357 = vor.u32 %v354, %v355
      %vm359 = vcmask 1040384
      %vm360 = vsmask.f32 256
      %vm361 = vmand %vm359, %vm360
      %v362 = vsel %vm361, 0, %v357
      %v363 = vrot.slane %v355, 1
      %v364 = vor.u32 %v352, %v363
      %vm366 = vcmask 1047552
      %vm367 = vsmask.f32 7424
      %vm368 = vmand %vm366, %vm367
      %v369 = vsel %vm368, %v364, 0
      %v370 = vld [vmem:[%s3] sm:$0xf]
      %v371 = vld [vmem:[%s3 + $0x4] sm:$0xf]
      %v372 = vld [vmem:[%s3 + $0x8] sm:$0xf]
      %v373 = vld [vmem:[%s3 + $0xc] sm:$0xf]
      %v374 = vld [vmem:[%s3 + $0x10] sm:$0xf]
      %v375 = vld [vmem:[%s3 + $0x14] sm:$0xf]
      %v376 = vld [vmem:[%s3 + $0x18] sm:$0xf]
      %v377 = vld [vmem:[%s3 + $0x1c] sm:$0xf]
      %v378 = vld [vmem:[%s3 + $0x20] sm:$0xf]
      %v379 = vld [vmem:[%s3 + $0x24] sm:$0xf]
      %v380 = vld [vmem:[%s3 + $0x28] sm:$0xf]
      %v381 = vld [vmem:[%s3 + $0x2c] sm:$0xf]
      %v382 = vld [vmem:[%s3 + $0x30] sm:$0xf]
      %v383 = vld [vmem:[%s3 + $0x34] sm:$0xf]
      %v384 = vld [vmem:[%s3 + $0x38] sm:$0xf]
      %v385 = vld [vmem:[%s3 + $0x3c] sm:$0xf]
      %s386 = scalar_lea.vmem %s3, 64
      %v387 = vld [vmem:[%s386] sm:$0xf]
      %v388 = vld [vmem:[%s386 + $0x4] sm:$0xf]
      %v389 = vld [vmem:[%s386 + $0x8] sm:$0xf]
      %v390 = vld [vmem:[%s386 + $0xc] sm:$0xf]
      %v391 = vld [vmem:[%s386 + $0x10] sm:$0xf]
      %v392 = vld [vmem:[%s386 + $0x14] sm:$0xf]
      %v393 = vld [vmem:[%s386 + $0x18] sm:$0xf]
      %v394 = vld [vmem:[%s386 + $0x1c] sm:$0xf]
      %v395 = vld [vmem:[%s386 + $0x20] sm:$0xf]
      %v396 = vld [vmem:[%s386 + $0x24] sm:$0xf]
      %v397 = vld [vmem:[%s386 + $0x28] sm:$0xf]
      %v398 = vld [vmem:[%s386 + $0x2c] sm:$0xf]
      %v399 = vld [vmem:[%s386 + $0x30] sm:$0xf]
      %v400 = vld [vmem:[%s386 + $0x34] sm:$0xf]
      %v401 = vld [vmem:[%s386 + $0x38] sm:$0xf]
      %v402 = vld [vmem:[%s386 + $0x3c] sm:$0xf]
      %v420 = vunpack.c.l.b16 %v387
      %v421 = vunpack.c.l.b16 %v388
      %v422 = vunpack.c.l.b16 %v389
      %v423 = vunpack.c.l.b16 %v390
      %v424 = vunpack.c.l.b16 %v391
      %v425 = vunpack.c.l.b16 %v392
      %v426 = vunpack.c.l.b16 %v393
      %v427 = vunpack.c.l.b16 %v394
      %v428 = vunpack.c.l.b16 %v395
      %v429 = vunpack.c.l.b16 %v396
      %v430 = vunpack.c.l.b16 %v397
      %v431 = vunpack.c.l.b16 %v398
      %v432 = vunpack.c.l.b16 %v399
      %v433 = vunpack.c.l.b16 %v400
      %v434 = vunpack.c.l.b16 %v401
      %v435 = vunpack.c.l.b16 %v402
      %v436 = vpack.c.b16 %v421, %v420
      %v437 = vpack.c.b16 %v423, %v422
      %v438 = vpack.c.b16 %v425, %v424
      %v439 = vpack.c.b16 %v427, %v426
      %v440 = vpack.c.b16 %v429, %v428
      %v441 = vpack.c.b16 %v431, %v430
      %v442 = vpack.c.b16 %v433, %v432
      %v443 = vpack.c.b16 %v435, %v434
      %452 = vmatpush.bf16.msra.mxu0 %v443
      %453 = vmatpush.bf16.msra.mxu0 %v442
      %454 = vmatpush.bf16.msra.mxu0 %v441
      %455 = vmatpush.bf16.msra.mxu0 %v440
      %456 = vmatpush.bf16.msra.mxu0 %v439
      %457 = vmatpush.bf16.msra.mxu0 %v438
      %458 = vmatpush.bf16.msra.mxu0 %v437
      %459 = vmatpush.bf16.msra.mxu0 %v436
      %460 = vmatmul.bf16.gmra.mxu0 %v350
      %v461 = vpop.f32.mrf.mxu0
      %v462 = vadd.f32 0.0, %v461
      %v463 = vpop.f32.mrf.mxu0
      %v464 = vadd.f32 0.0, %v463
      %465 = vdwg.mxu0
      %v482 = vunpack.c.l.b16 %v370
      %v483 = vunpack.c.l.b16 %v371
      %v484 = vunpack.c.l.b16 %v372
      %v485 = vunpack.c.l.b16 %v373
      %v486 = vunpack.c.l.b16 %v374
      %v487 = vunpack.c.l.b16 %v375
      %v488 = vunpack.c.l.b16 %v376
      %v489 = vunpack.c.l.b16 %v377
      %v490 = vunpack.c.l.b16 %v378
      %v491 = vunpack.c.l.b16 %v379
      %v492 = vunpack.c.l.b16 %v380
      %v493 = vunpack.c.l.b16 %v381
      %v494 = vunpack.c.l.b16 %v382
      %v495 = vunpack.c.l.b16 %v383
      %v496 = vunpack.c.l.b16 %v384
      %v497 = vunpack.c.l.b16 %v385
      %v498 = vpack.c.b16 %v483, %v482
      %v499 = vpack.c.b16 %v485, %v484
      %v500 = vpack.c.b16 %v487, %v486
      %v501 = vpack.c.b16 %v489, %v488
      %v502 = vpack.c.b16 %v491, %v490
      %v503 = vpack.c.b16 %v493, %v492
      %v504 = vpack.c.b16 %v495, %v494
      %v505 = vpack.c.b16 %v497, %v496
      %514 = vmatpush.bf16.msra.mxu0 %v505
      %515 = vmatpush.bf16.msra.mxu0 %v504
      %516 = vmatpush.bf16.msra.mxu0 %v503
      %517 = vmatpush.bf16.msra.mxu0 %v502
      %518 = vmatpush.bf16.msra.mxu0 %v501
      %519 = vmatpush.bf16.msra.mxu0 %v500
      %520 = vmatpush.bf16.msra.mxu0 %v499
      %521 = vmatpush.bf16.msra.mxu0 %v498
      %522 = vmatmul.bf16.gmra.mxu0 %v362
      %v523 = vpop.f32.mrf.mxu0
      %v524 = vadd.f32 %v462, %v523
      %v525 = vpop.f32.mrf.mxu0
      %v526 = vadd.f32 %v464, %v525
      %527 = vdwg.mxu0
      %s528 = scalar_lea.vmem %s3, 128
      %v529 = vld [vmem:[%s528] sm:$0xf]
      %v530 = vld [vmem:[%s528 + $0x4] sm:$0xf]
      %v531 = vld [vmem:[%s528 + $0x8] sm:$0xf]
      %v532 = vld [vmem:[%s528 + $0xc] sm:$0xf]
      %v533 = vld [vmem:[%s528 + $0x10] sm:$0xf]
      %v534 = vld [vmem:[%s528 + $0x14] sm:$0xf]
      %v535 = vld [vmem:[%s528 + $0x18] sm:$0xf]
      %v536 = vld [vmem:[%s528 + $0x1c] sm:$0xf]
      %v537 = vld [vmem:[%s528 + $0x20] sm:$0xf]
      %v538 = vld [vmem:[%s528 + $0x24] sm:$0xf]
      %v539 = vld [vmem:[%s528 + $0x28] sm:$0xf]
      %v540 = vld [vmem:[%s528 + $0x2c] sm:$0xf]
      %v541 = vld [vmem:[%s528 + $0x30] sm:$0xf]
      %v542 = vld [vmem:[%s528 + $0x34] sm:$0xf]
      %v543 = vld [vmem:[%s528 + $0x38] sm:$0xf]
      %v544 = vld [vmem:[%s528 + $0x3c] sm:$0xf]
      %v561 = vunpack.c.l.b16 %v529
      %v562 = vunpack.c.l.b16 %v530
      %v563 = vunpack.c.l.b16 %v531
      %v564 = vunpack.c.l.b16 %v532
      %v565 = vunpack.c.l.b16 %v533
      %v566 = vunpack.c.l.b16 %v534
      %v567 = vunpack.c.l.b16 %v535
      %v568 = vunpack.c.l.b16 %v536
      %v569 = vunpack.c.l.b16 %v537
      %v570 = vunpack.c.l.b16 %v538
      %v571 = vunpack.c.l.b16 %v539
      %v572 = vunpack.c.l.b16 %v540
      %v573 = vunpack.c.l.b16 %v541
      %v574 = vunpack.c.l.b16 %v542
      %v575 = vunpack.c.l.b16 %v543
      %v576 = vunpack.c.l.b16 %v544
      %v577 = vpack.c.b16 %v562, %v561
      %v578 = vpack.c.b16 %v564, %v563
      %v579 = vpack.c.b16 %v566, %v565
      %v580 = vpack.c.b16 %v568, %v567
      %v581 = vpack.c.b16 %v570, %v569
      %v582 = vpack.c.b16 %v572, %v571
      %v583 = vpack.c.b16 %v574, %v573
      %v584 = vpack.c.b16 %v576, %v575
      %593 = vmatpush.bf16.msra.mxu0 %v584
      %594 = vmatpush.bf16.msra.mxu0 %v583
      %595 = vmatpush.bf16.msra.mxu0 %v582
      %596 = vmatpush.bf16.msra.mxu0 %v581
      %597 = vmatpush.bf16.msra.mxu0 %v580
      %598 = vmatpush.bf16.msra.mxu0 %v579
      %599 = vmatpush.bf16.msra.mxu0 %v578
      %600 = vmatpush.bf16.msra.mxu0 %v577
      %601 = vmatmul.bf16.gmra.mxu0 %v369
      %v602 = vpop.f32.mrf.mxu0
      %v603 = vadd.f32 0.0, %v602
      %v604 = vpop.f32.mrf.mxu0
      %v605 = vadd.f32 0.0, %v604
      %606 = vdwg.mxu0
      %v607 = vadd.f32 %v524, %v603
      %v608 = vadd.f32 %v526, %v605
      %v609 = vadd.f32 %v607, %v608
      %v610 = vrot.slane %v609, 4
      %v611 = vadd.f32 %v609, %v610
      %v612 = vrot.slane %v611, 2
      %v613 = vadd.f32 %v611, %v612
      %v614 = vrot.slane %v613, 1
      %v615 = vadd.f32 %v613, %v614
      %616 = vst [vmem:[%s238] sm:$0x1] %v615
      %v617 = vmul.f32 %v607, %v607
      %v618 = vmul.f32 %v608, %v608
      %v619 = vadd.f32 %v617, %v618
      %v620 = vrot.slane %v619, 4
      %v621 = vadd.f32 %v619, %v620
      %v622 = vrot.slane %v621, 2
      %v623 = vadd.f32 %v621, %v622
      %v624 = vrot.slane %v623, 1
      %v625 = vadd.f32 %v623, %v624
      %626 = vst [vmem:[%s238 + $0x1] sm:$0x1] %v625
      %v627 = vpack.c.bf16 %v607, %v607
      %v628 = vpack.c.bf16 %v608, %v608
      %629 = vst [vmem:[%s233] sm:$0xf] %v627
      %630 = vst [vmem:[%s233 + $0x4] sm:$0xf] %v628
      %s631 = smul.u32 2, %s17
      %p632 = scmp.lt.s32.totalorder %s631, 3
      %s633 = scalar_select %p632, %s631, 3
      %s634 = smul.addr %s633, 4
      %s635 = scalar_lea.vmem %s4, %s634
      %p636 = scmp.lt.s32.totalorder %s17, 1
      %s637 = scalar_select %p636, %s17, 1
      %s638 = smul.addr %s637, 2
      %s639 = scalar_lea.vmem %s5, %s638
      // Predicated region
      $region37: #{residual_block_nhwc.4} parent=35 // pred_check
        %p640 = pneg %p124
      $region38: #{residual_block_nhwc.4} parent=35 // pred_check_branch
        %642 = sbr.rel (%p640) target = $region40
      $region39: #{residual_block_nhwc.4} parent=35 // pred_region
        %s643 = smul.u32 2, %s17
      $region40: #{residual_block_nhwc.4} parent=35 // pred_fallthru
        _
      // Predicated region
      $region41: #{residual_block_nhwc.4} parent=35 // pred_check
        %p644 = pneg %p150
      $region42: #{residual_block_nhwc.4} parent=35 // pred_check_branch
        %646 = sbr.rel (%p644) target = $region44
      $region43: #{residual_block_nhwc.4} parent=35 // pred_region
        _
      $region44: #{residual_block_nhwc.4} parent=35 // pred_fallthru
        _
    $region36: #{residual_block_nhwc.4} parent=5 // pred_fallthru
      _
    %p647 = scmp.le.s32.totalorder 2, %s12
    // Predicated region
    $region45: #{residual_block_nhwc.4} parent=5 // pred_check
      %p648 = pneg %p647
    $region46: #{residual_block_nhwc.4} parent=5 // pred_check_branch
      %650 = sbr.rel (%p648) target = $region48
    $region47: #{residual_block_nhwc.4} parent=5 // pred_region
      %s651 = ssub.s32 %s12, 2
      // Predicated region
      $region49: #{residual_block_nhwc.4} parent=47 // pred_check
        %p652 = pneg %p130
      $region50: #{residual_block_nhwc.4} parent=47 // pred_check_branch
        %654 = sbr.rel (%p652) target = $region52
      $region51: #{residual_block_nhwc.4} parent=47 // pred_region
        %s655 = smul.u32 2, %s18
        %p656 = scmp.lt.s32.totalorder %s655, 3
        %s657 = scalar_select %p656, %s655, 3
        %s658 = smul.addr %s657, 4
        %s659 = scalar_lea.vmem %s4, %s658
      $region52: #{residual_block_nhwc.4} parent=47 // pred_fallthru
        _
      // Predicated region
      $region53: #{residual_block_nhwc.4} parent=47 // pred_check
        %p660 = pneg %p156
      $region54: #{residual_block_nhwc.4} parent=47 // pred_check_branch
        %662 = sbr.rel (%p660) target = $region56
      $region55: #{residual_block_nhwc.4} parent=47 // pred_region
        %p663 = scmp.lt.s32.totalorder %s18, 1
        %s664 = scalar_select %p663, %s18, 1
        %s665 = smul.addr %s664, 2
        %s666 = scalar_lea.vmem %s5, %s665
      $region56: #{residual_block_nhwc.4} parent=47 // pred_fallthru
        _
    $region48: #{residual_block_nhwc.4} parent=5 // pred_fallthru
      _
  $region6: #{residual_block_nhwc.4} parent=0 // loop_footer
    %s16 = sadd.s32 1, %s12
  $region7: #{residual_block_nhwc.4} parent=0 // loop_footer_branch
    %11 = sbr.rel target = $region3
  $region8: #{residual_block_nhwc.4} parent=0 // loop_exit
    _

</llo_original>
